<compile_context>
chip_gen: v6e
topology: v6e:2x2x1
jax: 0.10.0
libtpu: 0.0.40
codegen_flags: <defaults>
</compile_context>

<pallas_src>
import jax
import jax.numpy as jnp
from jax.experimental import pallas as pl
from jax.experimental.pallas import tpu as pltpu

IN_FEATURES = 17280   # fixed by the module definition
OUT_FEATURES = 1


def wdnet_kernel(w_ref, wt_ref, o_ref):
    """One batch tile, whole K: out = sum_k (w^2 * weight^2)."""
    w = w_ref[...].astype(jnp.float32)      # (TB, K)
    wt = wt_ref[...].astype(jnp.float32)    # (1, K)  broadcasts over TB
    # Elementwise squares on the VPU, single cross-lane reduce per tile.
    o_ref[...] = jnp.sum((w * w) * (wt * wt), axis=-1, keepdims=True)


def wdnet_forward(w, weight, *, tb=64):
    """w: (B, 17280) f32, weight: (1, 17280) f32 -> (B, 1) f32."""
    B, K = w.shape
    assert K == IN_FEATURES and weight.shape == (OUT_FEATURES, K)

    # Batch tile: whole batch if small (block dim == full dim is always
    # legal), otherwise a sublane-aligned tile with tail padding so the
    # (8, 128) BlockSpec rule holds.
    if B <= tb:
        TB, pad = B, 0
    else:
        TB = tb                      # multiple of 8 by construction
        pad = (-B) % TB
    w_in = jnp.pad(w, ((0, pad), (0, 0))) if pad else w
    n_b = (B + pad) // TB

    out = pl.pallas_call(
        wdnet_kernel,
        out_shape=jax.ShapeDtypeStruct((B + pad, OUT_FEATURES), jnp.float32),
        grid=(n_b,),
        in_specs=[
            # Full-K batch tile, walks the batch axis.
            pl.BlockSpec((TB, K), lambda b: (b, 0)),
            # Weight tile: constant block index -> stays resident in VMEM.
            pl.BlockSpec((OUT_FEATURES, K), lambda b: (0, 0)),
        ],
        out_specs=pl.BlockSpec((TB, OUT_FEATURES), lambda b: (b, 0)),
        compiler_params=pltpu.CompilerParams(
            dimension_semantics=("parallel",),
        ),
    )(w_in, weight)

    return out[:B] if pad else out


if __name__ == "__main__":
    key = jax.random.PRNGKey(0)
    k_w, k_p = jax.random.split(key)

    B = 2
    # Example input (batch of flattened feature vectors).
    x = jax.random.normal(k_w, (B, IN_FEATURES), dtype=jnp.float32)
    # Deterministic parameter init matching nn.init.uniform_(w, 0.0, 0.01).
    fc1_weight = jax.random.uniform(
        k_p, (OUT_FEATURES, IN_FEATURES), dtype=jnp.float32,
        minval=0.0, maxval=0.01)

    out = wdnet_forward(x, fc1_weight)
    out = jax.block_until_ready(out)

    # Pure-JAX reference check of the PyTorch semantics.
    ref = (x * x) @ (fc1_weight * fc1_weight).T
    assert out.shape == (B, OUT_FEATURES)
    assert jnp.allclose(out, ref, rtol=1e-5, atol=1e-5)

    print("KERNEL_OK")
</pallas_src>

<mosaic_0001>
module attributes {stable_mosaic.version = 11 : i64} {
  func.func @wdnet_kernel(%arg0: i32, %arg1: memref<2x17280xf32, #tpu.memory_space<vmem>>, %arg2: memref<1x17280xf32, #tpu.memory_space<vmem>>, %arg3: memref<2x1xf32, #tpu.memory_space<vmem>>) attributes {dimension_semantics = [#tpu.dimension_semantics<parallel>], iteration_bounds = array<i64: 1>, scalar_prefetch = 0 : i64, scratch_operands = 0 : i64, tpu.core_type = #tpu.core_type<tc>, window_params = [{transform_indices = @transform_0, window_bounds = array<i64: 2, 17280>}, {pipeline_mode = #tpu.pipeline_mode<synchronous>, transform_indices = @transform_1, window_bounds = array<i64: 1, 17280>}, {transform_indices = @transform_2, window_bounds = array<i64: 2, 1>}]} {
    %c0 = arith.constant 0 : index
    %c0_0 = arith.constant 0 : index
    %0 = vector.load %arg1[%c0, %c0_0] : memref<2x17280xf32, #tpu.memory_space<vmem>>, vector<2x17280xf32>
    %c0_1 = arith.constant 0 : index
    %c0_2 = arith.constant 0 : index
    %1 = vector.load %arg2[%c0_1, %c0_2] : memref<1x17280xf32, #tpu.memory_space<vmem>>, vector<1x17280xf32>
    %2 = arith.mulf %0, %0 : vector<2x17280xf32>
    %3 = arith.mulf %1, %1 : vector<1x17280xf32>
    %4 = vector.broadcast %3 : vector<1x17280xf32> to vector<2x17280xf32>
    %5 = arith.mulf %2, %4 : vector<2x17280xf32>
    %cst = arith.constant dense<0.000000e+00> : vector<2xf32>
    %6 = vector.multi_reduction <add>, %5, %cst [1] : vector<2x17280xf32> to vector<2xf32>
    %7 = vector.shape_cast %6 : vector<2xf32> to vector<2x1xf32>
    %c0_3 = arith.constant 0 : index
    %c0_4 = arith.constant 0 : index
    %8 = vector.load %arg3[%c0_3, %c0_4] : memref<2x1xf32, #tpu.memory_space<vmem>>, vector<2x1xf32>
    tpu.vector_store %arg3[%c0_3, %c0_4], %7 {strides = array<i32>} : memref<2x1xf32, #tpu.memory_space<vmem>>, vector<2x1xf32>,
    return
  }
  func.func @transform_0(%arg0: i32) -> (i32, i32) {
    %c0_i32 = arith.constant 0 : i32
    %c0_i32_0 = arith.constant 0 : i32
    return %arg0, %c0_i32 : i32, i32
  }
  func.func @transform_1(%arg0: i32) -> (i32, i32) {
    %c0_i32 = arith.constant 0 : i32
    %c0_i32_0 = arith.constant 0 : i32
    %c0_i32_1 = arith.constant 0 : i32
    return %c0_i32, %c0_i32_0 : i32, i32
  }
  func.func @transform_2(%arg0: i32) -> (i32, i32) {
    %c0_i32 = arith.constant 0 : i32
    %c0_i32_0 = arith.constant 0 : i32
    return %arg0, %c0_i32 : i32, i32
  }
}

</mosaic_0001>

<llo_original>
// kernel: tpu_custom_call.1
$region0: #{tpu_custom_call.1}
  #allocation0 [shape = 'u32[]', space=smem, size = 0x4, offset = 0x4, fixed_abs, tag = 'smem constant byte address 0x4 - core index']
  #allocation1 [shape = 'u32[144,128]{1,0:T(1,128)}', space=vmem, size = 0x12000, scoped, tag = 'internal scratch']
  %s0 = inlined_call_operand.hbm [shape: f32[2,17280], index: 0, kind: input, shape index: {}]
  %s1 = inlined_call_operand.hbm [shape: f32[1,17280], index: 1, kind: input, shape index: {}]
  %s2 = inlined_call_operand.vmem [shape: f32[2,1], index: 2, kind: output, shape index: {}]
  %s3 = sld [smem:[#allocation0]]
  $region26: #{tpu_custom_call.1} parent=0
    _
  %s5 = ssub.s32 1, %s3
  %s6 = scalar_select 0, %s5, %s3
  $region1: #{tpu_custom_call.1} parent=0
    #allocation2 [shape = 'u8[138240]{0}', space=vmem, size = 0x21c00, scoped, tag = 'input window, operand 0, single buffered']
    #allocation3 [shape = 's32[1]{0}', space=sflag, size = 0x4, scoped, tag = 'scoped memory for tpu_custom_call.1']
    #allocation4 [shape = 'u8[69120]{0}', space=vmem, size = 0x11000, scoped, tag = 'input window, operand 1, single buffered']
    #allocation5 [shape = 's32[1]{0}', space=sflag, size = 0x4, scoped, tag = 'scoped memory for tpu_custom_call.1']
    %7 = vsyncpa [#allocation3], 0
    %8 = vsyncpa [#allocation5], 0
    // Predicated region
    $region2: #{tpu_custom_call.1} parent=1 // pred_check
      _
    $region3: #{tpu_custom_call.1} parent=1 // pred_check_branch
      %10 = sbr.rel (0) target = $region5
    $region4: #{tpu_custom_call.1} parent=1 // pred_region
      %s12 = ssub.s32 4320, 4320
      %13 = vsyncadd [#allocation3], %s12
      %s15 = sshll.u32 [#allocation2], 4
      %s16 = int_to_ptr.vmem [resolvable:$true] %s15
      %18 = dma.hbm_to_vmem [thread:$0]  %s0, 4320, %s16, [#allocation3]
    $region5: #{tpu_custom_call.1} parent=1 // pred_fallthru
      _
    // Predicated region
    $region6: #{tpu_custom_call.1} parent=1 // pred_check
      _
    $region7: #{tpu_custom_call.1} parent=1 // pred_check_branch
      %20 = sbr.rel (0) target = $region9
    $region8: #{tpu_custom_call.1} parent=1 // pred_region
      %s22 = ssub.s32 2160, 2160
      %23 = vsyncadd [#allocation5], %s22
      %s25 = sshll.u32 [#allocation4], 4
      %s26 = int_to_ptr.vmem [resolvable:$true] %s25
      %28 = dma.hbm_to_vmem [thread:$0]  %s1, 2160, %s26, [#allocation5]
    $region9: #{tpu_custom_call.1} parent=1 // pred_fallthru
      _
    // Predicated region
    $region10: #{tpu_custom_call.1} parent=1 // pred_check
      _
    $region11: #{tpu_custom_call.1} parent=1 // pred_check_branch
      %30 = sbr.rel (0) target = $region13
    $region12: #{tpu_custom_call.1} parent=1 // pred_region
      %31 = dma.done [#allocation3], 4320
    $region13: #{tpu_custom_call.1} parent=1 // pred_fallthru
      _
    // Predicated region
    $region14: #{tpu_custom_call.1} parent=1 // pred_check
      _
    $region15: #{tpu_custom_call.1} parent=1 // pred_check_branch
      %33 = sbr.rel (0) target = $region17
    $region16: #{tpu_custom_call.1} parent=1 // pred_region
      %34 = dma.done [#allocation5], 2160
    $region17: #{tpu_custom_call.1} parent=1 // pred_fallthru
      _
    %v35 = vld [vmem:[#allocation2] sm:$0xff]
    %v36 = vld [vmem:[#allocation2 + $0x8] sm:$0xff]
    %v37 = vld [vmem:[#allocation2 + $0x10] sm:$0xff]
    %v38 = vld [vmem:[#allocation2 + $0x18] sm:$0xff]
    %v39 = vld [vmem:[#allocation2 + $0x20] sm:$0xff]
    %v40 = vld [vmem:[#allocation2 + $0x28] sm:$0xff]
    %v41 = vld [vmem:[#allocation2 + $0x30] sm:$0xff]
    %v42 = vld [vmem:[#allocation2 + $0x38] sm:$0xff]
    %v43 = vld [vmem:[#allocation2 + $0x40] sm:$0xff]
    %v44 = vld [vmem:[#allocation2 + $0x48] sm:$0xff]
    %v45 = vld [vmem:[#allocation2 + $0x50] sm:$0xff]
    %v46 = vld [vmem:[#allocation2 + $0x58] sm:$0xff]
    %v47 = vld [vmem:[#allocation2 + $0x60] sm:$0xff]
    %v48 = vld [vmem:[#allocation2 + $0x68] sm:$0xff]
    %v49 = vld [vmem:[#allocation2 + $0x70] sm:$0xff]
    %v50 = vld [vmem:[#allocation2 + $0x78] sm:$0xff]
    %v51 = vld [vmem:[#allocation2 + $0x80] sm:$0xff]
    %v52 = vld [vmem:[#allocation2 + $0x88] sm:$0xff]
    %v53 = vld [vmem:[#allocation2 + $0x90] sm:$0xff]
    %v54 = vld [vmem:[#allocation2 + $0x98] sm:$0xff]
    %v55 = vld [vmem:[#allocation2 + $0xa0] sm:$0xff]
    %v56 = vld [vmem:[#allocation2 + $0xa8] sm:$0xff]
    %v57 = vld [vmem:[#allocation2 + $0xb0] sm:$0xff]
    %v58 = vld [vmem:[#allocation2 + $0xb8] sm:$0xff]
    %v59 = vld [vmem:[#allocation2 + $0xc0] sm:$0xff]
    %v60 = vld [vmem:[#allocation2 + $0xc8] sm:$0xff]
    %v61 = vld [vmem:[#allocation2 + $0xd0] sm:$0xff]
    %v62 = vld [vmem:[#allocation2 + $0xd8] sm:$0xff]
    %v63 = vld [vmem:[#allocation2 + $0xe0] sm:$0xff]
    %v64 = vld [vmem:[#allocation2 + $0xe8] sm:$0xff]
    %v65 = vld [vmem:[#allocation2 + $0xf0] sm:$0xff]
    %v66 = vld [vmem:[#allocation2 + $0xf8] sm:$0xff]
    %v67 = vld [vmem:[#allocation2 + $0x100] sm:$0xff]
    %v68 = vld [vmem:[#allocation2 + $0x108] sm:$0x3f]
    %v69 = vld [vmem:[#allocation4] sm:$0xff]
    %v70 = vld [vmem:[#allocation4 + $0x8] sm:$0xff]
    %v71 = vld [vmem:[#allocation4 + $0x10] sm:$0xff]
    %v72 = vld [vmem:[#allocation4 + $0x18] sm:$0xff]
    %v73 = vld [vmem:[#allocation4 + $0x20] sm:$0xff]
    %v74 = vld [vmem:[#allocation4 + $0x28] sm:$0xff]
    %v75 = vld [vmem:[#allocation4 + $0x30] sm:$0xff]
    %v76 = vld [vmem:[#allocation4 + $0x38] sm:$0xff]
    %v77 = vld [vmem:[#allocation4 + $0x40] sm:$0xff]
    %v78 = vld [vmem:[#allocation4 + $0x48] sm:$0xff]
    %v79 = vld [vmem:[#allocation4 + $0x50] sm:$0xff]
    %v80 = vld [vmem:[#allocation4 + $0x58] sm:$0xff]
    %v81 = vld [vmem:[#allocation4 + $0x60] sm:$0xff]
    %v82 = vld [vmem:[#allocation4 + $0x68] sm:$0xff]
    %v83 = vld [vmem:[#allocation4 + $0x70] sm:$0xff]
    %v84 = vld [vmem:[#allocation4 + $0x78] sm:$0xff]
    %v85 = vld [vmem:[#allocation4 + $0x80] sm:$0xff]
    %v86 = vmul.f32 %v35, %v35
    %v87 = vmul.f32 %v36, %v36
    %v88 = vmul.f32 %v37, %v37
    %v89 = vmul.f32 %v38, %v38
    %v90 = vmul.f32 %v39, %v39
    %v91 = vmul.f32 %v40, %v40
    %v92 = vmul.f32 %v41, %v41
    %v93 = vmul.f32 %v42, %v42
    %v94 = vmul.f32 %v43, %v43
    %v95 = vmul.f32 %v44, %v44
    %v96 = vmul.f32 %v45, %v45
    %v97 = vmul.f32 %v46, %v46
    %v98 = vmul.f32 %v47, %v47
    %v99 = vmul.f32 %v48, %v48
    %v100 = vmul.f32 %v49, %v49
    %v101 = vmul.f32 %v50, %v50
    %v102 = vmul.f32 %v51, %v51
    %v103 = vmul.f32 %v52, %v52
    %v104 = vmul.f32 %v53, %v53
    %v105 = vmul.f32 %v54, %v54
    %v106 = vmul.f32 %v55, %v55
    %v107 = vmul.f32 %v56, %v56
    %v108 = vmul.f32 %v57, %v57
    %v109 = vmul.f32 %v58, %v58
    %v110 = vmul.f32 %v59, %v59
    %v111 = vmul.f32 %v60, %v60
    %v112 = vmul.f32 %v61, %v61
    %v113 = vmul.f32 %v62, %v62
    %v114 = vmul.f32 %v63, %v63
    %v115 = vmul.f32 %v64, %v64
    %v116 = vmul.f32 %v65, %v65
    %v117 = vmul.f32 %v66, %v66
    %v118 = vmul.f32 %v67, %v67
    %v119 = vmul.f32 %v68, %v68
    %v120 = vmul.f32 %v69, %v69
    %v121 = vmul.f32 %v70, %v70
    %v122 = vmul.f32 %v71, %v71
    %v123 = vmul.f32 %v72, %v72
    %v124 = vmul.f32 %v73, %v73
    %v125 = vmul.f32 %v74, %v74
    %v126 = vmul.f32 %v75, %v75
    %v127 = vmul.f32 %v76, %v76
    %v128 = vmul.f32 %v77, %v77
    %v129 = vmul.f32 %v78, %v78
    %v130 = vmul.f32 %v79, %v79
    %v131 = vmul.f32 %v80, %v80
    %v132 = vmul.f32 %v81, %v81
    %v133 = vmul.f32 %v82, %v82
    %v134 = vmul.f32 %v83, %v83
    %v135 = vmul.f32 %v84, %v84
    %v136 = vmul.f32 %v85, %v85
    %v154 = vlaneseq
    %v155 = vshrl.u32 %v154, 7
    %v156 = vsub.s32 0, %v155
    %v157 = vrot.slane %v120, %v156
    %v158 = vlaneseq
    %v159 = vshrl.u32 %v158, 7
    %v160 = vsub.s32 1, %v159
    %v161 = vrot.slane %v120, %v160
    %v162 = vlaneseq
    %v163 = vshrl.u32 %v162, 7
    %v164 = vsub.s32 2, %v163
    %v165 = vrot.slane %v120, %v164
    %v166 = vlaneseq
    %v167 = vshrl.u32 %v166, 7
    %v168 = vsub.s32 3, %v167
    %v169 = vrot.slane %v120, %v168
    %v170 = vlaneseq
    %v171 = vshrl.u32 %v170, 7
    %v172 = vsub.s32 4, %v171
    %v173 = vrot.slane %v120, %v172
    %v174 = vlaneseq
    %v175 = vshrl.u32 %v174, 7
    %v176 = vsub.s32 5, %v175
    %v177 = vrot.slane %v120, %v176
    %v178 = vlaneseq
    %v179 = vshrl.u32 %v178, 7
    %v180 = vsub.s32 6, %v179
    %v181 = vrot.slane %v120, %v180
    %v182 = vlaneseq
    %v183 = vshrl.u32 %v182, 7
    %v184 = vsub.s32 7, %v183
    %v185 = vrot.slane %v120, %v184
    %v186 = vlaneseq
    %v187 = vshrl.u32 %v186, 7
    %v188 = vsub.s32 0, %v187
    %v189 = vrot.slane %v121, %v188
    %v190 = vlaneseq
    %v191 = vshrl.u32 %v190, 7
    %v192 = vsub.s32 1, %v191
    %v193 = vrot.slane %v121, %v192
    %v194 = vlaneseq
    %v195 = vshrl.u32 %v194, 7
    %v196 = vsub.s32 2, %v195
    %v197 = vrot.slane %v121, %v196
    %v198 = vlaneseq
    %v199 = vshrl.u32 %v198, 7
    %v200 = vsub.s32 3, %v199
    %v201 = vrot.slane %v121, %v200
    %v202 = vlaneseq
    %v203 = vshrl.u32 %v202, 7
    %v204 = vsub.s32 4, %v203
    %v205 = vrot.slane %v121, %v204
    %v206 = vlaneseq
    %v207 = vshrl.u32 %v206, 7
    %v208 = vsub.s32 5, %v207
    %v209 = vrot.slane %v121, %v208
    %v210 = vlaneseq
    %v211 = vshrl.u32 %v210, 7
    %v212 = vsub.s32 6, %v211
    %v213 = vrot.slane %v121, %v212
    %v214 = vlaneseq
    %v215 = vshrl.u32 %v214, 7
    %v216 = vsub.s32 7, %v215
    %v217 = vrot.slane %v121, %v216
    %v218 = vlaneseq
    %v219 = vshrl.u32 %v218, 7
    %v220 = vsub.s32 0, %v219
    %v221 = vrot.slane %v122, %v220
    %v222 = vlaneseq
    %v223 = vshrl.u32 %v222, 7
    %v224 = vsub.s32 1, %v223
    %v225 = vrot.slane %v122, %v224
    %v226 = vlaneseq
    %v227 = vshrl.u32 %v226, 7
    %v228 = vsub.s32 2, %v227
    %v229 = vrot.slane %v122, %v228
    %v230 = vlaneseq
    %v231 = vshrl.u32 %v230, 7
    %v232 = vsub.s32 3, %v231
    %v233 = vrot.slane %v122, %v232
    %v234 = vlaneseq
    %v235 = vshrl.u32 %v234, 7
    %v236 = vsub.s32 4, %v235
    %v237 = vrot.slane %v122, %v236
    %v238 = vlaneseq
    %v239 = vshrl.u32 %v238, 7
    %v240 = vsub.s32 5, %v239
    %v241 = vrot.slane %v122, %v240
    %v242 = vlaneseq
    %v243 = vshrl.u32 %v242, 7
    %v244 = vsub.s32 6, %v243
    %v245 = vrot.slane %v122, %v244
    %v246 = vlaneseq
    %v247 = vshrl.u32 %v246, 7
    %v248 = vsub.s32 7, %v247
    %v249 = vrot.slane %v122, %v248
    %v250 = vlaneseq
    %v251 = vshrl.u32 %v250, 7
    %v252 = vsub.s32 0, %v251
    %v253 = vrot.slane %v123, %v252
    %v254 = vlaneseq
    %v255 = vshrl.u32 %v254, 7
    %v256 = vsub.s32 1, %v255
    %v257 = vrot.slane %v123, %v256
    %v258 = vlaneseq
    %v259 = vshrl.u32 %v258, 7
    %v260 = vsub.s32 2, %v259
    %v261 = vrot.slane %v123, %v260
    %v262 = vlaneseq
    %v263 = vshrl.u32 %v262, 7
    %v264 = vsub.s32 3, %v263
    %v265 = vrot.slane %v123, %v264
    %v266 = vlaneseq
    %v267 = vshrl.u32 %v266, 7
    %v268 = vsub.s32 4, %v267
    %v269 = vrot.slane %v123, %v268
    %v270 = vlaneseq
    %v271 = vshrl.u32 %v270, 7
    %v272 = vsub.s32 5, %v271
    %v273 = vrot.slane %v123, %v272
    %v274 = vlaneseq
    %v275 = vshrl.u32 %v274, 7
    %v276 = vsub.s32 6, %v275
    %v277 = vrot.slane %v123, %v276
    %v278 = vlaneseq
    %v279 = vshrl.u32 %v278, 7
    %v280 = vsub.s32 7, %v279
    %v281 = vrot.slane %v123, %v280
    %v282 = vlaneseq
    %v283 = vshrl.u32 %v282, 7
    %v284 = vsub.s32 0, %v283
    %v285 = vrot.slane %v124, %v284
    %v286 = vlaneseq
    %v287 = vshrl.u32 %v286, 7
    %v288 = vsub.s32 1, %v287
    %v289 = vrot.slane %v124, %v288
    %v290 = vlaneseq
    %v291 = vshrl.u32 %v290, 7
    %v292 = vsub.s32 2, %v291
    %v293 = vrot.slane %v124, %v292
    %v294 = vlaneseq
    %v295 = vshrl.u32 %v294, 7
    %v296 = vsub.s32 3, %v295
    %v297 = vrot.slane %v124, %v296
    %v298 = vlaneseq
    %v299 = vshrl.u32 %v298, 7
    %v300 = vsub.s32 4, %v299
    %v301 = vrot.slane %v124, %v300
    %v302 = vlaneseq
    %v303 = vshrl.u32 %v302, 7
    %v304 = vsub.s32 5, %v303
    %v305 = vrot.slane %v124, %v304
    %v306 = vlaneseq
    %v307 = vshrl.u32 %v306, 7
    %v308 = vsub.s32 6, %v307
    %v309 = vrot.slane %v124, %v308
    %v310 = vlaneseq
    %v311 = vshrl.u32 %v310, 7
    %v312 = vsub.s32 7, %v311
    %v313 = vrot.slane %v124, %v312
    %v314 = vlaneseq
    %v315 = vshrl.u32 %v314, 7
    %v316 = vsub.s32 0, %v315
    %v317 = vrot.slane %v125, %v316
    %v318 = vlaneseq
    %v319 = vshrl.u32 %v318, 7
    %v320 = vsub.s32 1, %v319
    %v321 = vrot.slane %v125, %v320
    %v322 = vlaneseq
    %v323 = vshrl.u32 %v322, 7
    %v324 = vsub.s32 2, %v323
    %v325 = vrot.slane %v125, %v324
    %v326 = vlaneseq
    %v327 = vshrl.u32 %v326, 7
    %v328 = vsub.s32 3, %v327
    %v329 = vrot.slane %v125, %v328
    %v330 = vlaneseq
    %v331 = vshrl.u32 %v330, 7
    %v332 = vsub.s32 4, %v331
    %v333 = vrot.slane %v125, %v332
    %v334 = vlaneseq
    %v335 = vshrl.u32 %v334, 7
    %v336 = vsub.s32 5, %v335
    %v337 = vrot.slane %v125, %v336
    %v338 = vlaneseq
    %v339 = vshrl.u32 %v338, 7
    %v340 = vsub.s32 6, %v339
    %v341 = vrot.slane %v125, %v340
    %v342 = vlaneseq
    %v343 = vshrl.u32 %v342, 7
    %v344 = vsub.s32 7, %v343
    %v345 = vrot.slane %v125, %v344
    %v346 = vlaneseq
    %v347 = vshrl.u32 %v346, 7
    %v348 = vsub.s32 0, %v347
    %v349 = vrot.slane %v126, %v348
    %v350 = vlaneseq
    %v351 = vshrl.u32 %v350, 7
    %v352 = vsub.s32 1, %v351
    %v353 = vrot.slane %v126, %v352
    %v354 = vlaneseq
    %v355 = vshrl.u32 %v354, 7
    %v356 = vsub.s32 2, %v355
    %v357 = vrot.slane %v126, %v356
    %v358 = vlaneseq
    %v359 = vshrl.u32 %v358, 7
    %v360 = vsub.s32 3, %v359
    %v361 = vrot.slane %v126, %v360
    %v362 = vlaneseq
    %v363 = vshrl.u32 %v362, 7
    %v364 = vsub.s32 4, %v363
    %v365 = vrot.slane %v126, %v364
    %v366 = vlaneseq
    %v367 = vshrl.u32 %v366, 7
    %v368 = vsub.s32 5, %v367
    %v369 = vrot.slane %v126, %v368
    %v370 = vlaneseq
    %v371 = vshrl.u32 %v370, 7
    %v372 = vsub.s32 6, %v371
    %v373 = vrot.slane %v126, %v372
    %v374 = vlaneseq
    %v375 = vshrl.u32 %v374, 7
    %v376 = vsub.s32 7, %v375
    %v377 = vrot.slane %v126, %v376
    %v378 = vlaneseq
    %v379 = vshrl.u32 %v378, 7
    %v380 = vsub.s32 0, %v379
    %v381 = vrot.slane %v127, %v380
    %v382 = vlaneseq
    %v383 = vshrl.u32 %v382, 7
    %v384 = vsub.s32 1, %v383
    %v385 = vrot.slane %v127, %v384
    %v386 = vlaneseq
    %v387 = vshrl.u32 %v386, 7
    %v388 = vsub.s32 2, %v387
    %v389 = vrot.slane %v127, %v388
    %v390 = vlaneseq
    %v391 = vshrl.u32 %v390, 7
    %v392 = vsub.s32 3, %v391
    %v393 = vrot.slane %v127, %v392
    %v394 = vlaneseq
    %v395 = vshrl.u32 %v394, 7
    %v396 = vsub.s32 4, %v395
    %v397 = vrot.slane %v127, %v396
    %v398 = vlaneseq
    %v399 = vshrl.u32 %v398, 7
    %v400 = vsub.s32 5, %v399
    %v401 = vrot.slane %v127, %v400
    %v402 = vlaneseq
    %v403 = vshrl.u32 %v402, 7
    %v404 = vsub.s32 6, %v403
    %v405 = vrot.slane %v127, %v404
    %v406 = vlaneseq
    %v407 = vshrl.u32 %v406, 7
    %v408 = vsub.s32 7, %v407
    %v409 = vrot.slane %v127, %v408
    %v410 = vlaneseq
    %v411 = vshrl.u32 %v410, 7
    %v412 = vsub.s32 0, %v411
    %v413 = vrot.slane %v128, %v412
    %v414 = vlaneseq
    %v415 = vshrl.u32 %v414, 7
    %v416 = vsub.s32 1, %v415
    %v417 = vrot.slane %v128, %v416
    %v418 = vlaneseq
    %v419 = vshrl.u32 %v418, 7
    %v420 = vsub.s32 2, %v419
    %v421 = vrot.slane %v128, %v420
    %v422 = vlaneseq
    %v423 = vshrl.u32 %v422, 7
    %v424 = vsub.s32 3, %v423
    %v425 = vrot.slane %v128, %v424
    %v426 = vlaneseq
    %v427 = vshrl.u32 %v426, 7
    %v428 = vsub.s32 4, %v427
    %v429 = vrot.slane %v128, %v428
    %v430 = vlaneseq
    %v431 = vshrl.u32 %v430, 7
    %v432 = vsub.s32 5, %v431
    %v433 = vrot.slane %v128, %v432
    %v434 = vlaneseq
    %v435 = vshrl.u32 %v434, 7
    %v436 = vsub.s32 6, %v435
    %v437 = vrot.slane %v128, %v436
    %v438 = vlaneseq
    %v439 = vshrl.u32 %v438, 7
    %v440 = vsub.s32 7, %v439
    %v441 = vrot.slane %v128, %v440
    %v442 = vlaneseq
    %v443 = vshrl.u32 %v442, 7
    %v444 = vsub.s32 0, %v443
    %v445 = vrot.slane %v129, %v444
    %v446 = vlaneseq
    %v447 = vshrl.u32 %v446, 7
    %v448 = vsub.s32 1, %v447
    %v449 = vrot.slane %v129, %v448
    %v450 = vlaneseq
    %v451 = vshrl.u32 %v450, 7
    %v452 = vsub.s32 2, %v451
    %v453 = vrot.slane %v129, %v452
    %v454 = vlaneseq
    %v455 = vshrl.u32 %v454, 7
    %v456 = vsub.s32 3, %v455
    %v457 = vrot.slane %v129, %v456
    %v458 = vlaneseq
    %v459 = vshrl.u32 %v458, 7
    %v460 = vsub.s32 4, %v459
    %v461 = vrot.slane %v129, %v460
    %v462 = vlaneseq
    %v463 = vshrl.u32 %v462, 7
    %v464 = vsub.s32 5, %v463
    %v465 = vrot.slane %v129, %v464
    %v466 = vlaneseq
    %v467 = vshrl.u32 %v466, 7
    %v468 = vsub.s32 6, %v467
    %v469 = vrot.slane %v129, %v468
    %v470 = vlaneseq
    %v471 = vshrl.u32 %v470, 7
    %v472 = vsub.s32 7, %v471
    %v473 = vrot.slane %v129, %v472
    %v474 = vlaneseq
    %v475 = vshrl.u32 %v474, 7
    %v476 = vsub.s32 0, %v475
    %v477 = vrot.slane %v130, %v476
    %v478 = vlaneseq
    %v479 = vshrl.u32 %v478, 7
    %v480 = vsub.s32 1, %v479
    %v481 = vrot.slane %v130, %v480
    %v482 = vlaneseq
    %v483 = vshrl.u32 %v482, 7
    %v484 = vsub.s32 2, %v483
    %v485 = vrot.slane %v130, %v484
    %v486 = vlaneseq
    %v487 = vshrl.u32 %v486, 7
    %v488 = vsub.s32 3, %v487
    %v489 = vrot.slane %v130, %v488
    %v490 = vlaneseq
    %v491 = vshrl.u32 %v490, 7
    %v492 = vsub.s32 4, %v491
    %v493 = vrot.slane %v130, %v492
    %v494 = vlaneseq
    %v495 = vshrl.u32 %v494, 7
    %v496 = vsub.s32 5, %v495
    %v497 = vrot.slane %v130, %v496
    %v498 = vlaneseq
    %v499 = vshrl.u32 %v498, 7
    %v500 = vsub.s32 6, %v499
    %v501 = vrot.slane %v130, %v500
    %v502 = vlaneseq
    %v503 = vshrl.u32 %v502, 7
    %v504 = vsub.s32 7, %v503
    %v505 = vrot.slane %v130, %v504
    %v506 = vlaneseq
    %v507 = vshrl.u32 %v506, 7
    %v508 = vsub.s32 0, %v507
    %v509 = vrot.slane %v131, %v508
    %v510 = vlaneseq
    %v511 = vshrl.u32 %v510, 7
    %v512 = vsub.s32 1, %v511
    %v513 = vrot.slane %v131, %v512
    %v514 = vlaneseq
    %v515 = vshrl.u32 %v514, 7
    %v516 = vsub.s32 2, %v515
    %v517 = vrot.slane %v131, %v516
    %v518 = vlaneseq
    %v519 = vshrl.u32 %v518, 7
    %v520 = vsub.s32 3, %v519
    %v521 = vrot.slane %v131, %v520
    %v522 = vlaneseq
    %v523 = vshrl.u32 %v522, 7
    %v524 = vsub.s32 4, %v523
    %v525 = vrot.slane %v131, %v524
    %v526 = vlaneseq
    %v527 = vshrl.u32 %v526, 7
    %v528 = vsub.s32 5, %v527
    %v529 = vrot.slane %v131, %v528
    %v530 = vlaneseq
    %v531 = vshrl.u32 %v530, 7
    %v532 = vsub.s32 6, %v531
    %v533 = vrot.slane %v131, %v532
    %v534 = vlaneseq
    %v535 = vshrl.u32 %v534, 7
    %v536 = vsub.s32 7, %v535
    %v537 = vrot.slane %v131, %v536
    %v538 = vlaneseq
    %v539 = vshrl.u32 %v538, 7
    %v540 = vsub.s32 0, %v539
    %v541 = vrot.slane %v132, %v540
    %v542 = vlaneseq
    %v543 = vshrl.u32 %v542, 7
    %v544 = vsub.s32 1, %v543
    %v545 = vrot.slane %v132, %v544
    %v546 = vlaneseq
    %v547 = vshrl.u32 %v546, 7
    %v548 = vsub.s32 2, %v547
    %v549 = vrot.slane %v132, %v548
    %v550 = vlaneseq
    %v551 = vshrl.u32 %v550, 7
    %v552 = vsub.s32 3, %v551
    %v553 = vrot.slane %v132, %v552
    %v554 = vlaneseq
    %v555 = vshrl.u32 %v554, 7
    %v556 = vsub.s32 4, %v555
    %v557 = vrot.slane %v132, %v556
    %v558 = vlaneseq
    %v559 = vshrl.u32 %v558, 7
    %v560 = vsub.s32 5, %v559
    %v561 = vrot.slane %v132, %v560
    %v562 = vlaneseq
    %v563 = vshrl.u32 %v562, 7
    %v564 = vsub.s32 6, %v563
    %v565 = vrot.slane %v132, %v564
    %v566 = vlaneseq
    %v567 = vshrl.u32 %v566, 7
    %v568 = vsub.s32 7, %v567
    %v569 = vrot.slane %v132, %v568
    %v570 = vlaneseq
    %v571 = vshrl.u32 %v570, 7
    %v572 = vsub.s32 0, %v571
    %v573 = vrot.slane %v133, %v572
    %v574 = vlaneseq
    %v575 = vshrl.u32 %v574, 7
    %v576 = vsub.s32 1, %v575
    %v577 = vrot.slane %v133, %v576
    %v578 = vlaneseq
    %v579 = vshrl.u32 %v578, 7
    %v580 = vsub.s32 2, %v579
    %v581 = vrot.slane %v133, %v580
    %v582 = vlaneseq
    %v583 = vshrl.u32 %v582, 7
    %v584 = vsub.s32 3, %v583
    %v585 = vrot.slane %v133, %v584
    %v586 = vlaneseq
    %v587 = vshrl.u32 %v586, 7
    %v588 = vsub.s32 4, %v587
    %v589 = vrot.slane %v133, %v588
    %v590 = vlaneseq
    %v591 = vshrl.u32 %v590, 7
    %v592 = vsub.s32 5, %v591
    %v593 = vrot.slane %v133, %v592
    %v594 = vlaneseq
    %v595 = vshrl.u32 %v594, 7
    %v596 = vsub.s32 6, %v595
    %v597 = vrot.slane %v133, %v596
    %v598 = vlaneseq
    %v599 = vshrl.u32 %v598, 7
    %v600 = vsub.s32 7, %v599
    %v601 = vrot.slane %v133, %v600
    %v602 = vlaneseq
    %v603 = vshrl.u32 %v602, 7
    %v604 = vsub.s32 0, %v603
    %v605 = vrot.slane %v134, %v604
    %v606 = vlaneseq
    %v607 = vshrl.u32 %v606, 7
    %v608 = vsub.s32 1, %v607
    %v609 = vrot.slane %v134, %v608
    %v610 = vlaneseq
    %v611 = vshrl.u32 %v610, 7
    %v612 = vsub.s32 2, %v611
    %v613 = vrot.slane %v134, %v612
    %v614 = vlaneseq
    %v615 = vshrl.u32 %v614, 7
    %v616 = vsub.s32 3, %v615
    %v617 = vrot.slane %v134, %v616
    %v618 = vlaneseq
    %v619 = vshrl.u32 %v618, 7
    %v620 = vsub.s32 4, %v619
    %v621 = vrot.slane %v134, %v620
    %v622 = vlaneseq
    %v623 = vshrl.u32 %v622, 7
    %v624 = vsub.s32 5, %v623
    %v625 = vrot.slane %v134, %v624
    %v626 = vlaneseq
    %v627 = vshrl.u32 %v626, 7
    %v628 = vsub.s32 6, %v627
    %v629 = vrot.slane %v134, %v628
    %v630 = vlaneseq
    %v631 = vshrl.u32 %v630, 7
    %v632 = vsub.s32 7, %v631
    %v633 = vrot.slane %v134, %v632
    %v634 = vlaneseq
    %v635 = vshrl.u32 %v634, 7
    %v636 = vsub.s32 0, %v635
    %v637 = vrot.slane %v135, %v636
    %v638 = vlaneseq
    %v639 = vshrl.u32 %v638, 7
    %v640 = vsub.s32 1, %v639
    %v641 = vrot.slane %v135, %v640
    %v642 = vlaneseq
    %v643 = vshrl.u32 %v642, 7
    %v644 = vsub.s32 2, %v643
    %v645 = vrot.slane %v135, %v644
    %v646 = vlaneseq
    %v647 = vshrl.u32 %v646, 7
    %v648 = vsub.s32 3, %v647
    %v649 = vrot.slane %v135, %v648
    %v650 = vlaneseq
    %v651 = vshrl.u32 %v650, 7
    %v652 = vsub.s32 4, %v651
    %v653 = vrot.slane %v135, %v652
    %v654 = vlaneseq
    %v655 = vshrl.u32 %v654, 7
    %v656 = vsub.s32 5, %v655
    %v657 = vrot.slane %v135, %v656
    %v658 = vlaneseq
    %v659 = vshrl.u32 %v658, 7
    %v660 = vsub.s32 6, %v659
    %v661 = vrot.slane %v135, %v660
    %v662 = vlaneseq
    %v663 = vshrl.u32 %v662, 7
    %v664 = vsub.s32 7, %v663
    %v665 = vrot.slane %v135, %v664
    %v666 = vlaneseq
    %v667 = vshrl.u32 %v666, 7
    %v668 = vsub.s32 0, %v667
    %v669 = vrot.slane %v136, %v668
    %v670 = vlaneseq
    %v671 = vshrl.u32 %v670, 7
    %v672 = vsub.s32 1, %v671
    %v673 = vrot.slane %v136, %v672
    %v674 = vlaneseq
    %v675 = vshrl.u32 %v674, 7
    %v676 = vsub.s32 2, %v675
    %v677 = vrot.slane %v136, %v676
    %v678 = vlaneseq
    %v679 = vshrl.u32 %v678, 7
    %v680 = vsub.s32 3, %v679
    %v681 = vrot.slane %v136, %v680
    %v682 = vlaneseq
    %v683 = vshrl.u32 %v682, 7
    %v684 = vsub.s32 4, %v683
    %v685 = vrot.slane %v136, %v684
    %v686 = vlaneseq
    %v687 = vshrl.u32 %v686, 7
    %v688 = vsub.s32 5, %v687
    %v689 = vrot.slane %v136, %v688
    %v690 = vlaneseq
    %v691 = vshrl.u32 %v690, 7
    %v692 = vsub.s32 6, %v691
    %v693 = vrot.slane %v136, %v692
    %v694 = vcombine.low %v157, %v161
    %v695 = vcombine.low %v165, %v169
    %v697 = vunpack.c.l.s4 1983009808
    %v698 = vunpack.c.0.s8 %v697
    %v699 = vlaneseq
    %v700 = vshrl.u32 %v699, 7
    %v701 = vsub.s32 %v698, %v700
    %v702 = vrot.slane %v694, %v701
    %v704 = vunpack.c.l.s4 1983009808
    %v705 = vunpack.c.0.s8 %v704
    %v706 = vlaneseq
    %v707 = vshrl.u32 %v706, 7
    %v708 = vsub.s32 %v705, %v707
    %v709 = vrot.slane %v695, %v708
    %v710 = vcombine.low %v702, %v709
    %v711 = vcombine.low %v173, %v177
    %v712 = vcombine.low %v181, %v185
    %v714 = vunpack.c.l.s4 1983009808
    %v715 = vunpack.c.0.s8 %v714
    %v716 = vlaneseq
    %v717 = vshrl.u32 %v716, 7
    %v718 = vsub.s32 %v715, %v717
    %v719 = vrot.slane %v711, %v718
    %v721 = vunpack.c.l.s4 1983009808
    %v722 = vunpack.c.0.s8 %v721
    %v723 = vlaneseq
    %v724 = vshrl.u32 %v723, 7
    %v725 = vsub.s32 %v722, %v724
    %v726 = vrot.slane %v712, %v725
    %v727 = vcombine.low %v719, %v726
    %v728 = vcombine.low %v189, %v193
    %v729 = vcombine.low %v197, %v201
    %v731 = vunpack.c.l.s4 1983009808
    %v732 = vunpack.c.0.s8 %v731
    %v733 = vlaneseq
    %v734 = vshrl.u32 %v733, 7
    %v735 = vsub.s32 %v732, %v734
    %v736 = vrot.slane %v728, %v735
    %v738 = vunpack.c.l.s4 1983009808
    %v739 = vunpack.c.0.s8 %v738
    %v740 = vlaneseq
    %v741 = vshrl.u32 %v740, 7
    %v742 = vsub.s32 %v739, %v741
    %v743 = vrot.slane %v729, %v742
    %v744 = vcombine.low %v736, %v743
    %v745 = vcombine.low %v205, %v209
    %v746 = vcombine.low %v213, %v217
    %v748 = vunpack.c.l.s4 1983009808
    %v749 = vunpack.c.0.s8 %v748
    %v750 = vlaneseq
    %v751 = vshrl.u32 %v750, 7
    %v752 = vsub.s32 %v749, %v751
    %v753 = vrot.slane %v745, %v752
    %v755 = vunpack.c.l.s4 1983009808
    %v756 = vunpack.c.0.s8 %v755
    %v757 = vlaneseq
    %v758 = vshrl.u32 %v757, 7
    %v759 = vsub.s32 %v756, %v758
    %v760 = vrot.slane %v746, %v759
    %v761 = vcombine.low %v753, %v760
    %v762 = vcombine.low %v221, %v225
    %v763 = vcombine.low %v229, %v233
    %v765 = vunpack.c.l.s4 1983009808
    %v766 = vunpack.c.0.s8 %v765
    %v767 = vlaneseq
    %v768 = vshrl.u32 %v767, 7
    %v769 = vsub.s32 %v766, %v768
    %v770 = vrot.slane %v762, %v769
    %v772 = vunpack.c.l.s4 1983009808
    %v773 = vunpack.c.0.s8 %v772
    %v774 = vlaneseq
    %v775 = vshrl.u32 %v774, 7
    %v776 = vsub.s32 %v773, %v775
    %v777 = vrot.slane %v763, %v776
    %v778 = vcombine.low %v770, %v777
    %v779 = vcombine.low %v237, %v241
    %v780 = vcombine.low %v245, %v249
    %v782 = vunpack.c.l.s4 1983009808
    %v783 = vunpack.c.0.s8 %v782
    %v784 = vlaneseq
    %v785 = vshrl.u32 %v784, 7
    %v786 = vsub.s32 %v783, %v785
    %v787 = vrot.slane %v779, %v786
    %v789 = vunpack.c.l.s4 1983009808
    %v790 = vunpack.c.0.s8 %v789
    %v791 = vlaneseq
    %v792 = vshrl.u32 %v791, 7
    %v793 = vsub.s32 %v790, %v792
    %v794 = vrot.slane %v780, %v793
    %v795 = vcombine.low %v787, %v794
    %v796 = vcombine.low %v253, %v257
    %v797 = vcombine.low %v261, %v265
    %v799 = vunpack.c.l.s4 1983009808
    %v800 = vunpack.c.0.s8 %v799
    %v801 = vlaneseq
    %v802 = vshrl.u32 %v801, 7
    %v803 = vsub.s32 %v800, %v802
    %v804 = vrot.slane %v796, %v803
    %v806 = vunpack.c.l.s4 1983009808
    %v807 = vunpack.c.0.s8 %v806
    %v808 = vlaneseq
    %v809 = vshrl.u32 %v808, 7
    %v810 = vsub.s32 %v807, %v809
    %v811 = vrot.slane %v797, %v810
    %v812 = vcombine.low %v804, %v811
    %v813 = vcombine.low %v269, %v273
    %v814 = vcombine.low %v277, %v281
    %v816 = vunpack.c.l.s4 1983009808
    %v817 = vunpack.c.0.s8 %v816
    %v818 = vlaneseq
    %v819 = vshrl.u32 %v818, 7
    %v820 = vsub.s32 %v817, %v819
    %v821 = vrot.slane %v813, %v820
    %v823 = vunpack.c.l.s4 1983009808
    %v824 = vunpack.c.0.s8 %v823
    %v825 = vlaneseq
    %v826 = vshrl.u32 %v825, 7
    %v827 = vsub.s32 %v824, %v826
    %v828 = vrot.slane %v814, %v827
    %v829 = vcombine.low %v821, %v828
    %v830 = vcombine.low %v285, %v289
    %v831 = vcombine.low %v293, %v297
    %v833 = vunpack.c.l.s4 1983009808
    %v834 = vunpack.c.0.s8 %v833
    %v835 = vlaneseq
    %v836 = vshrl.u32 %v835, 7
    %v837 = vsub.s32 %v834, %v836
    %v838 = vrot.slane %v830, %v837
    %v840 = vunpack.c.l.s4 1983009808
    %v841 = vunpack.c.0.s8 %v840
    %v842 = vlaneseq
    %v843 = vshrl.u32 %v842, 7
    %v844 = vsub.s32 %v841, %v843
    %v845 = vrot.slane %v831, %v844
    %v846 = vcombine.low %v838, %v845
    %v847 = vcombine.low %v301, %v305
    %v848 = vcombine.low %v309, %v313
    %v850 = vunpack.c.l.s4 1983009808
    %v851 = vunpack.c.0.s8 %v850
    %v852 = vlaneseq
    %v853 = vshrl.u32 %v852, 7
    %v854 = vsub.s32 %v851, %v853
    %v855 = vrot.slane %v847, %v854
    %v857 = vunpack.c.l.s4 1983009808
    %v858 = vunpack.c.0.s8 %v857
    %v859 = vlaneseq
    %v860 = vshrl.u32 %v859, 7
    %v861 = vsub.s32 %v858, %v860
    %v862 = vrot.slane %v848, %v861
    %v863 = vcombine.low %v855, %v862
    %v864 = vcombine.low %v317, %v321
    %v865 = vcombine.low %v325, %v329
    %v867 = vunpack.c.l.s4 1983009808
    %v868 = vunpack.c.0.s8 %v867
    %v869 = vlaneseq
    %v870 = vshrl.u32 %v869, 7
    %v871 = vsub.s32 %v868, %v870
    %v872 = vrot.slane %v864, %v871
    %v874 = vunpack.c.l.s4 1983009808
    %v875 = vunpack.c.0.s8 %v874
    %v876 = vlaneseq
    %v877 = vshrl.u32 %v876, 7
    %v878 = vsub.s32 %v875, %v877
    %v879 = vrot.slane %v865, %v878
    %v880 = vcombine.low %v872, %v879
    %v881 = vcombine.low %v333, %v337
    %v882 = vcombine.low %v341, %v345
    %v884 = vunpack.c.l.s4 1983009808
    %v885 = vunpack.c.0.s8 %v884
    %v886 = vlaneseq
    %v887 = vshrl.u32 %v886, 7
    %v888 = vsub.s32 %v885, %v887
    %v889 = vrot.slane %v881, %v888
    %v891 = vunpack.c.l.s4 1983009808
    %v892 = vunpack.c.0.s8 %v891
    %v893 = vlaneseq
    %v894 = vshrl.u32 %v893, 7
    %v895 = vsub.s32 %v892, %v894
    %v896 = vrot.slane %v882, %v895
    %v897 = vcombine.low %v889, %v896
    %v898 = vcombine.low %v349, %v353
    %v899 = vcombine.low %v357, %v361
    %v901 = vunpack.c.l.s4 1983009808
    %v902 = vunpack.c.0.s8 %v901
    %v903 = vlaneseq
    %v904 = vshrl.u32 %v903, 7
    %v905 = vsub.s32 %v902, %v904
    %v906 = vrot.slane %v898, %v905
    %v908 = vunpack.c.l.s4 1983009808
    %v909 = vunpack.c.0.s8 %v908
    %v910 = vlaneseq
    %v911 = vshrl.u32 %v910, 7
    %v912 = vsub.s32 %v909, %v911
    %v913 = vrot.slane %v899, %v912
    %v914 = vcombine.low %v906, %v913
    %v915 = vcombine.low %v365, %v369
    %v916 = vcombine.low %v373, %v377
    %v918 = vunpack.c.l.s4 1983009808
    %v919 = vunpack.c.0.s8 %v918
    %v920 = vlaneseq
    %v921 = vshrl.u32 %v920, 7
    %v922 = vsub.s32 %v919, %v921
    %v923 = vrot.slane %v915, %v922
    %v925 = vunpack.c.l.s4 1983009808
    %v926 = vunpack.c.0.s8 %v925
    %v927 = vlaneseq
    %v928 = vshrl.u32 %v927, 7
    %v929 = vsub.s32 %v926, %v928
    %v930 = vrot.slane %v916, %v929
    %v931 = vcombine.low %v923, %v930
    %v932 = vcombine.low %v381, %v385
    %v933 = vcombine.low %v389, %v393
    %v935 = vunpack.c.l.s4 1983009808
    %v936 = vunpack.c.0.s8 %v935
    %v937 = vlaneseq
    %v938 = vshrl.u32 %v937, 7
    %v939 = vsub.s32 %v936, %v938
    %v940 = vrot.slane %v932, %v939
    %v942 = vunpack.c.l.s4 1983009808
    %v943 = vunpack.c.0.s8 %v942
    %v944 = vlaneseq
    %v945 = vshrl.u32 %v944, 7
    %v946 = vsub.s32 %v943, %v945
    %v947 = vrot.slane %v933, %v946
    %v948 = vcombine.low %v940, %v947
    %v949 = vcombine.low %v397, %v401
    %v950 = vcombine.low %v405, %v409
    %v952 = vunpack.c.l.s4 1983009808
    %v953 = vunpack.c.0.s8 %v952
    %v954 = vlaneseq
    %v955 = vshrl.u32 %v954, 7
    %v956 = vsub.s32 %v953, %v955
    %v957 = vrot.slane %v949, %v956
    %v959 = vunpack.c.l.s4 1983009808
    %v960 = vunpack.c.0.s8 %v959
    %v961 = vlaneseq
    %v962 = vshrl.u32 %v961, 7
    %v963 = vsub.s32 %v960, %v962
    %v964 = vrot.slane %v950, %v963
    %v965 = vcombine.low %v957, %v964
    %v966 = vcombine.low %v413, %v417
    %v967 = vcombine.low %v421, %v425
    %v969 = vunpack.c.l.s4 1983009808
    %v970 = vunpack.c.0.s8 %v969
    %v971 = vlaneseq
    %v972 = vshrl.u32 %v971, 7
    %v973 = vsub.s32 %v970, %v972
    %v974 = vrot.slane %v966, %v973
    %v976 = vunpack.c.l.s4 1983009808
    %v977 = vunpack.c.0.s8 %v976
    %v978 = vlaneseq
    %v979 = vshrl.u32 %v978, 7
    %v980 = vsub.s32 %v977, %v979
    %v981 = vrot.slane %v967, %v980
    %v982 = vcombine.low %v974, %v981
    %v983 = vcombine.low %v429, %v433
    %v984 = vcombine.low %v437, %v441
    %v986 = vunpack.c.l.s4 1983009808
    %v987 = vunpack.c.0.s8 %v986
    %v988 = vlaneseq
    %v989 = vshrl.u32 %v988, 7
    %v990 = vsub.s32 %v987, %v989
    %v991 = vrot.slane %v983, %v990
    %v993 = vunpack.c.l.s4 1983009808
    %v994 = vunpack.c.0.s8 %v993
    %v995 = vlaneseq
    %v996 = vshrl.u32 %v995, 7
    %v997 = vsub.s32 %v994, %v996
    %v998 = vrot.slane %v984, %v997
    %v999 = vcombine.low %v991, %v998
    %v1000 = vcombine.low %v445, %v449
    %v1001 = vcombine.low %v453, %v457
    %v1003 = vunpack.c.l.s4 1983009808
    %v1004 = vunpack.c.0.s8 %v1003
    %v1005 = vlaneseq
    %v1006 = vshrl.u32 %v1005, 7
    %v1007 = vsub.s32 %v1004, %v1006
    %v1008 = vrot.slane %v1000, %v1007
    %v1010 = vunpack.c.l.s4 1983009808
    %v1011 = vunpack.c.0.s8 %v1010
    %v1012 = vlaneseq
    %v1013 = vshrl.u32 %v1012, 7
    %v1014 = vsub.s32 %v1011, %v1013
    %v1015 = vrot.slane %v1001, %v1014
    %v1016 = vcombine.low %v1008, %v1015
    %v1017 = vcombine.low %v461, %v465
    %v1018 = vcombine.low %v469, %v473
    %v1020 = vunpack.c.l.s4 1983009808
    %v1021 = vunpack.c.0.s8 %v1020
    %v1022 = vlaneseq
    %v1023 = vshrl.u32 %v1022, 7
    %v1024 = vsub.s32 %v1021, %v1023
    %v1025 = vrot.slane %v1017, %v1024
    %v1027 = vunpack.c.l.s4 1983009808
    %v1028 = vunpack.c.0.s8 %v1027
    %v1029 = vlaneseq
    %v1030 = vshrl.u32 %v1029, 7
    %v1031 = vsub.s32 %v1028, %v1030
    %v1032 = vrot.slane %v1018, %v1031
    %v1033 = vcombine.low %v1025, %v1032
    %v1034 = vcombine.low %v477, %v481
    %v1035 = vcombine.low %v485, %v489
    %v1037 = vunpack.c.l.s4 1983009808
    %v1038 = vunpack.c.0.s8 %v1037
    %v1039 = vlaneseq
    %v1040 = vshrl.u32 %v1039, 7
    %v1041 = vsub.s32 %v1038, %v1040
    %v1042 = vrot.slane %v1034, %v1041
    %v1044 = vunpack.c.l.s4 1983009808
    %v1045 = vunpack.c.0.s8 %v1044
    %v1046 = vlaneseq
    %v1047 = vshrl.u32 %v1046, 7
    %v1048 = vsub.s32 %v1045, %v1047
    %v1049 = vrot.slane %v1035, %v1048
    %v1050 = vcombine.low %v1042, %v1049
    %v1051 = vcombine.low %v493, %v497
    %v1052 = vcombine.low %v501, %v505
    %v1054 = vunpack.c.l.s4 1983009808
    %v1055 = vunpack.c.0.s8 %v1054
    %v1056 = vlaneseq
    %v1057 = vshrl.u32 %v1056, 7
    %v1058 = vsub.s32 %v1055, %v1057
    %v1059 = vrot.slane %v1051, %v1058
    %v1061 = vunpack.c.l.s4 1983009808
    %v1062 = vunpack.c.0.s8 %v1061
    %v1063 = vlaneseq
    %v1064 = vshrl.u32 %v1063, 7
    %v1065 = vsub.s32 %v1062, %v1064
    %v1066 = vrot.slane %v1052, %v1065
    %v1067 = vcombine.low %v1059, %v1066
    %v1068 = vcombine.low %v509, %v513
    %v1069 = vcombine.low %v517, %v521
    %v1071 = vunpack.c.l.s4 1983009808
    %v1072 = vunpack.c.0.s8 %v1071
    %v1073 = vlaneseq
    %v1074 = vshrl.u32 %v1073, 7
    %v1075 = vsub.s32 %v1072, %v1074
    %v1076 = vrot.slane %v1068, %v1075
    %v1078 = vunpack.c.l.s4 1983009808
    %v1079 = vunpack.c.0.s8 %v1078
    %v1080 = vlaneseq
    %v1081 = vshrl.u32 %v1080, 7
    %v1082 = vsub.s32 %v1079, %v1081
    %v1083 = vrot.slane %v1069, %v1082
    %v1084 = vcombine.low %v1076, %v1083
    %v1085 = vcombine.low %v525, %v529
    %v1086 = vcombine.low %v533, %v537
    %v1088 = vunpack.c.l.s4 1983009808
    %v1089 = vunpack.c.0.s8 %v1088
    %v1090 = vlaneseq
    %v1091 = vshrl.u32 %v1090, 7
    %v1092 = vsub.s32 %v1089, %v1091
    %v1093 = vrot.slane %v1085, %v1092
    %v1095 = vunpack.c.l.s4 1983009808
    %v1096 = vunpack.c.0.s8 %v1095
    %v1097 = vlaneseq
    %v1098 = vshrl.u32 %v1097, 7
    %v1099 = vsub.s32 %v1096, %v1098
    %v1100 = vrot.slane %v1086, %v1099
    %v1101 = vcombine.low %v1093, %v1100
    %v1102 = vcombine.low %v541, %v545
    %v1103 = vcombine.low %v549, %v553
    %v1105 = vunpack.c.l.s4 1983009808
    %v1106 = vunpack.c.0.s8 %v1105
    %v1107 = vlaneseq
    %v1108 = vshrl.u32 %v1107, 7
    %v1109 = vsub.s32 %v1106, %v1108
    %v1110 = vrot.slane %v1102, %v1109
    %v1112 = vunpack.c.l.s4 1983009808
    %v1113 = vunpack.c.0.s8 %v1112
    %v1114 = vlaneseq
    %v1115 = vshrl.u32 %v1114, 7
    %v1116 = vsub.s32 %v1113, %v1115
    %v1117 = vrot.slane %v1103, %v1116
    %v1118 = vcombine.low %v1110, %v1117
    %v1119 = vcombine.low %v557, %v561
    %v1120 = vcombine.low %v565, %v569
    %v1122 = vunpack.c.l.s4 1983009808
    %v1123 = vunpack.c.0.s8 %v1122
    %v1124 = vlaneseq
    %v1125 = vshrl.u32 %v1124, 7
    %v1126 = vsub.s32 %v1123, %v1125
    %v1127 = vrot.slane %v1119, %v1126
    %v1129 = vunpack.c.l.s4 1983009808
    %v1130 = vunpack.c.0.s8 %v1129
    %v1131 = vlaneseq
    %v1132 = vshrl.u32 %v1131, 7
    %v1133 = vsub.s32 %v1130, %v1132
    %v1134 = vrot.slane %v1120, %v1133
    %v1135 = vcombine.low %v1127, %v1134
    %v1136 = vcombine.low %v573, %v577
    %v1137 = vcombine.low %v581, %v585
    %v1139 = vunpack.c.l.s4 1983009808
    %v1140 = vunpack.c.0.s8 %v1139
    %v1141 = vlaneseq
    %v1142 = vshrl.u32 %v1141, 7
    %v1143 = vsub.s32 %v1140, %v1142
    %v1144 = vrot.slane %v1136, %v1143
    %v1146 = vunpack.c.l.s4 1983009808
    %v1147 = vunpack.c.0.s8 %v1146
    %v1148 = vlaneseq
    %v1149 = vshrl.u32 %v1148, 7
    %v1150 = vsub.s32 %v1147, %v1149
    %v1151 = vrot.slane %v1137, %v1150
    %v1152 = vcombine.low %v1144, %v1151
    %v1153 = vcombine.low %v589, %v593
    %v1154 = vcombine.low %v597, %v601
    %v1156 = vunpack.c.l.s4 1983009808
    %v1157 = vunpack.c.0.s8 %v1156
    %v1158 = vlaneseq
    %v1159 = vshrl.u32 %v1158, 7
    %v1160 = vsub.s32 %v1157, %v1159
    %v1161 = vrot.slane %v1153, %v1160
    %v1163 = vunpack.c.l.s4 1983009808
    %v1164 = vunpack.c.0.s8 %v1163
    %v1165 = vlaneseq
    %v1166 = vshrl.u32 %v1165, 7
    %v1167 = vsub.s32 %v1164, %v1166
    %v1168 = vrot.slane %v1154, %v1167
    %v1169 = vcombine.low %v1161, %v1168
    %v1170 = vcombine.low %v605, %v609
    %v1171 = vcombine.low %v613, %v617
    %v1173 = vunpack.c.l.s4 1983009808
    %v1174 = vunpack.c.0.s8 %v1173
    %v1175 = vlaneseq
    %v1176 = vshrl.u32 %v1175, 7
    %v1177 = vsub.s32 %v1174, %v1176
    %v1178 = vrot.slane %v1170, %v1177
    %v1180 = vunpack.c.l.s4 1983009808
    %v1181 = vunpack.c.0.s8 %v1180
    %v1182 = vlaneseq
    %v1183 = vshrl.u32 %v1182, 7
    %v1184 = vsub.s32 %v1181, %v1183
    %v1185 = vrot.slane %v1171, %v1184
    %v1186 = vcombine.low %v1178, %v1185
    %v1187 = vcombine.low %v621, %v625
    %v1188 = vcombine.low %v629, %v633
    %v1190 = vunpack.c.l.s4 1983009808
    %v1191 = vunpack.c.0.s8 %v1190
    %v1192 = vlaneseq
    %v1193 = vshrl.u32 %v1192, 7
    %v1194 = vsub.s32 %v1191, %v1193
    %v1195 = vrot.slane %v1187, %v1194
    %v1197 = vunpack.c.l.s4 1983009808
    %v1198 = vunpack.c.0.s8 %v1197
    %v1199 = vlaneseq
    %v1200 = vshrl.u32 %v1199, 7
    %v1201 = vsub.s32 %v1198, %v1200
    %v1202 = vrot.slane %v1188, %v1201
    %v1203 = vcombine.low %v1195, %v1202
    %v1204 = vcombine.low %v637, %v641
    %v1205 = vcombine.low %v645, %v649
    %v1207 = vunpack.c.l.s4 1983009808
    %v1208 = vunpack.c.0.s8 %v1207
    %v1209 = vlaneseq
    %v1210 = vshrl.u32 %v1209, 7
    %v1211 = vsub.s32 %v1208, %v1210
    %v1212 = vrot.slane %v1204, %v1211
    %v1214 = vunpack.c.l.s4 1983009808
    %v1215 = vunpack.c.0.s8 %v1214
    %v1216 = vlaneseq
    %v1217 = vshrl.u32 %v1216, 7
    %v1218 = vsub.s32 %v1215, %v1217
    %v1219 = vrot.slane %v1205, %v1218
    %v1220 = vcombine.low %v1212, %v1219
    %v1221 = vcombine.low %v653, %v657
    %v1222 = vcombine.low %v661, %v665
    %v1224 = vunpack.c.l.s4 1983009808
    %v1225 = vunpack.c.0.s8 %v1224
    %v1226 = vlaneseq
    %v1227 = vshrl.u32 %v1226, 7
    %v1228 = vsub.s32 %v1225, %v1227
    %v1229 = vrot.slane %v1221, %v1228
    %v1231 = vunpack.c.l.s4 1983009808
    %v1232 = vunpack.c.0.s8 %v1231
    %v1233 = vlaneseq
    %v1234 = vshrl.u32 %v1233, 7
    %v1235 = vsub.s32 %v1232, %v1234
    %v1236 = vrot.slane %v1222, %v1235
    %v1237 = vcombine.low %v1229, %v1236
    %v1238 = vcombine.low %v669, %v673
    %v1239 = vcombine.low %v677, %v681
    %v1241 = vunpack.c.l.s4 1983009808
    %v1242 = vunpack.c.0.s8 %v1241
    %v1243 = vlaneseq
    %v1244 = vshrl.u32 %v1243, 7
    %v1245 = vsub.s32 %v1242, %v1244
    %v1246 = vrot.slane %v1238, %v1245
    %v1248 = vunpack.c.l.s4 1983009808
    %v1249 = vunpack.c.0.s8 %v1248
    %v1250 = vlaneseq
    %v1251 = vshrl.u32 %v1250, 7
    %v1252 = vsub.s32 %v1249, %v1251
    %v1253 = vrot.slane %v1239, %v1252
    %v1254 = vcombine.low %v1246, %v1253
    %v1255 = vcombine.low %v685, %v689
    %v1257 = vunpack.c.l.s4 1983009808
    %v1258 = vunpack.c.0.s8 %v1257
    %v1259 = vlaneseq
    %v1260 = vshrl.u32 %v1259, 7
    %v1261 = vsub.s32 %v1258, %v1260
    %v1262 = vrot.slane %v1255, %v1261
    %v1264 = vunpack.c.l.s4 1983009808
    %v1265 = vunpack.c.0.s8 %v1264
    %v1266 = vlaneseq
    %v1267 = vshrl.u32 %v1266, 7
    %v1268 = vsub.s32 %v1265, %v1267
    %v1269 = vrot.slane %v693, %v1268
    %v1270 = vcombine.low %v1262, %v1269
    %v1305 = vmul.f32 %v86, %v710
    %v1306 = vmul.f32 %v87, %v727
    %v1307 = vmul.f32 %v88, %v744
    %v1308 = vmul.f32 %v89, %v761
    %v1309 = vmul.f32 %v90, %v778
    %v1310 = vmul.f32 %v91, %v795
    %v1311 = vmul.f32 %v92, %v812
    %v1312 = vmul.f32 %v93, %v829
    %v1313 = vmul.f32 %v94, %v846
    %v1314 = vmul.f32 %v95, %v863
    %v1315 = vmul.f32 %v96, %v880
    %v1316 = vmul.f32 %v97, %v897
    %v1317 = vmul.f32 %v98, %v914
    %v1318 = vmul.f32 %v99, %v931
    %v1319 = vmul.f32 %v100, %v948
    %v1320 = vmul.f32 %v101, %v965
    %v1321 = vmul.f32 %v102, %v982
    %v1322 = vmul.f32 %v103, %v999
    %v1323 = vmul.f32 %v104, %v1016
    %v1324 = vmul.f32 %v105, %v1033
    %v1325 = vmul.f32 %v106, %v1050
    %v1326 = vmul.f32 %v107, %v1067
    %v1327 = vmul.f32 %v108, %v1084
    %v1328 = vmul.f32 %v109, %v1101
    %v1329 = vmul.f32 %v110, %v1118
    %v1330 = vmul.f32 %v111, %v1135
    %v1331 = vmul.f32 %v112, %v1152
    %v1332 = vmul.f32 %v113, %v1169
    %v1333 = vmul.f32 %v114, %v1186
    %v1334 = vmul.f32 %v115, %v1203
    %v1335 = vmul.f32 %v116, %v1220
    %v1336 = vmul.f32 %v117, %v1237
    %v1337 = vmul.f32 %v118, %v1254
    %v1338 = vmul.f32 %v119, %v1270
    %v1373 = vcombine.high %v1305, %v1305
    %v1375 = vunpack.c.l.s4 1983009808
    %v1376 = vunpack.c.0.s8 %v1375
    %v1377 = vlaneseq
    %v1378 = vshrl.u32 %v1377, 7
    %v1379 = vsub.s32 %v1376, %v1378
    %v1380 = vrot.slane %v1305, %v1379
    %v1382 = vunpack.c.l.s4 1983009808
    %v1383 = vunpack.c.0.s8 %v1382
    %v1384 = vlaneseq
    %v1385 = vshrl.u32 %v1384, 7
    %v1386 = vsub.s32 %v1383, %v1385
    %v1387 = vrot.slane %v1373, %v1386
    %v1388 = vcombine.high %v1380, %v1380
    %v1389 = vcombine.high %v1387, %v1387
    %v1390 = vcombine.high %v1306, %v1306
    %v1392 = vunpack.c.l.s4 1983009808
    %v1393 = vunpack.c.0.s8 %v1392
    %v1394 = vlaneseq
    %v1395 = vshrl.u32 %v1394, 7
    %v1396 = vsub.s32 %v1393, %v1395
    %v1397 = vrot.slane %v1306, %v1396
    %v1399 = vunpack.c.l.s4 1983009808
    %v1400 = vunpack.c.0.s8 %v1399
    %v1401 = vlaneseq
    %v1402 = vshrl.u32 %v1401, 7
    %v1403 = vsub.s32 %v1400, %v1402
    %v1404 = vrot.slane %v1390, %v1403
    %v1405 = vcombine.high %v1397, %v1397
    %v1406 = vcombine.high %v1404, %v1404
    %v1407 = vcombine.high %v1307, %v1307
    %v1409 = vunpack.c.l.s4 1983009808
    %v1410 = vunpack.c.0.s8 %v1409
    %v1411 = vlaneseq
    %v1412 = vshrl.u32 %v1411, 7
    %v1413 = vsub.s32 %v1410, %v1412
    %v1414 = vrot.slane %v1307, %v1413
    %v1416 = vunpack.c.l.s4 1983009808
    %v1417 = vunpack.c.0.s8 %v1416
    %v1418 = vlaneseq
    %v1419 = vshrl.u32 %v1418, 7
    %v1420 = vsub.s32 %v1417, %v1419
    %v1421 = vrot.slane %v1407, %v1420
    %v1422 = vcombine.high %v1414, %v1414
    %v1423 = vcombine.high %v1421, %v1421
    %v1424 = vcombine.high %v1308, %v1308
    %v1426 = vunpack.c.l.s4 1983009808
    %v1427 = vunpack.c.0.s8 %v1426
    %v1428 = vlaneseq
    %v1429 = vshrl.u32 %v1428, 7
    %v1430 = vsub.s32 %v1427, %v1429
    %v1431 = vrot.slane %v1308, %v1430
    %v1433 = vunpack.c.l.s4 1983009808
    %v1434 = vunpack.c.0.s8 %v1433
    %v1435 = vlaneseq
    %v1436 = vshrl.u32 %v1435, 7
    %v1437 = vsub.s32 %v1434, %v1436
    %v1438 = vrot.slane %v1424, %v1437
    %v1439 = vcombine.high %v1431, %v1431
    %v1440 = vcombine.high %v1438, %v1438
    %v1441 = vcombine.high %v1309, %v1309
    %v1443 = vunpack.c.l.s4 1983009808
    %v1444 = vunpack.c.0.s8 %v1443
    %v1445 = vlaneseq
    %v1446 = vshrl.u32 %v1445, 7
    %v1447 = vsub.s32 %v1444, %v1446
    %v1448 = vrot.slane %v1309, %v1447
    %v1450 = vunpack.c.l.s4 1983009808
    %v1451 = vunpack.c.0.s8 %v1450
    %v1452 = vlaneseq
    %v1453 = vshrl.u32 %v1452, 7
    %v1454 = vsub.s32 %v1451, %v1453
    %v1455 = vrot.slane %v1441, %v1454
    %v1456 = vcombine.high %v1448, %v1448
    %v1457 = vcombine.high %v1455, %v1455
    %v1458 = vcombine.high %v1310, %v1310
    %v1460 = vunpack.c.l.s4 1983009808
    %v1461 = vunpack.c.0.s8 %v1460
    %v1462 = vlaneseq
    %v1463 = vshrl.u32 %v1462, 7
    %v1464 = vsub.s32 %v1461, %v1463
    %v1465 = vrot.slane %v1310, %v1464
    %v1467 = vunpack.c.l.s4 1983009808
    %v1468 = vunpack.c.0.s8 %v1467
    %v1469 = vlaneseq
    %v1470 = vshrl.u32 %v1469, 7
    %v1471 = vsub.s32 %v1468, %v1470
    %v1472 = vrot.slane %v1458, %v1471
    %v1473 = vcombine.high %v1465, %v1465
    %v1474 = vcombine.high %v1472, %v1472
    %v1475 = vcombine.high %v1311, %v1311
    %v1477 = vunpack.c.l.s4 1983009808
    %v1478 = vunpack.c.0.s8 %v1477
    %v1479 = vlaneseq
    %v1480 = vshrl.u32 %v1479, 7
    %v1481 = vsub.s32 %v1478, %v1480
    %v1482 = vrot.slane %v1311, %v1481
    %v1484 = vunpack.c.l.s4 1983009808
    %v1485 = vunpack.c.0.s8 %v1484
    %v1486 = vlaneseq
    %v1487 = vshrl.u32 %v1486, 7
    %v1488 = vsub.s32 %v1485, %v1487
    %v1489 = vrot.slane %v1475, %v1488
    %v1490 = vcombine.high %v1482, %v1482
    %v1491 = vcombine.high %v1489, %v1489
    %v1492 = vcombine.high %v1312, %v1312
    %v1494 = vunpack.c.l.s4 1983009808
    %v1495 = vunpack.c.0.s8 %v1494
    %v1496 = vlaneseq
    %v1497 = vshrl.u32 %v1496, 7
    %v1498 = vsub.s32 %v1495, %v1497
    %v1499 = vrot.slane %v1312, %v1498
    %v1501 = vunpack.c.l.s4 1983009808
    %v1502 = vunpack.c.0.s8 %v1501
    %v1503 = vlaneseq
    %v1504 = vshrl.u32 %v1503, 7
    %v1505 = vsub.s32 %v1502, %v1504
    %v1506 = vrot.slane %v1492, %v1505
    %v1507 = vcombine.high %v1499, %v1499
    %v1508 = vcombine.high %v1506, %v1506
    %v1509 = vcombine.high %v1313, %v1313
    %v1511 = vunpack.c.l.s4 1983009808
    %v1512 = vunpack.c.0.s8 %v1511
    %v1513 = vlaneseq
    %v1514 = vshrl.u32 %v1513, 7
    %v1515 = vsub.s32 %v1512, %v1514
    %v1516 = vrot.slane %v1313, %v1515
    %v1518 = vunpack.c.l.s4 1983009808
    %v1519 = vunpack.c.0.s8 %v1518
    %v1520 = vlaneseq
    %v1521 = vshrl.u32 %v1520, 7
    %v1522 = vsub.s32 %v1519, %v1521
    %v1523 = vrot.slane %v1509, %v1522
    %v1524 = vcombine.high %v1516, %v1516
    %v1525 = vcombine.high %v1523, %v1523
    %v1526 = vcombine.high %v1314, %v1314
    %v1528 = vunpack.c.l.s4 1983009808
    %v1529 = vunpack.c.0.s8 %v1528
    %v1530 = vlaneseq
    %v1531 = vshrl.u32 %v1530, 7
    %v1532 = vsub.s32 %v1529, %v1531
    %v1533 = vrot.slane %v1314, %v1532
    %v1535 = vunpack.c.l.s4 1983009808
    %v1536 = vunpack.c.0.s8 %v1535
    %v1537 = vlaneseq
    %v1538 = vshrl.u32 %v1537, 7
    %v1539 = vsub.s32 %v1536, %v1538
    %v1540 = vrot.slane %v1526, %v1539
    %v1541 = vcombine.high %v1533, %v1533
    %v1542 = vcombine.high %v1540, %v1540
    %v1543 = vcombine.high %v1315, %v1315
    %v1545 = vunpack.c.l.s4 1983009808
    %v1546 = vunpack.c.0.s8 %v1545
    %v1547 = vlaneseq
    %v1548 = vshrl.u32 %v1547, 7
    %v1549 = vsub.s32 %v1546, %v1548
    %v1550 = vrot.slane %v1315, %v1549
    %v1552 = vunpack.c.l.s4 1983009808
    %v1553 = vunpack.c.0.s8 %v1552
    %v1554 = vlaneseq
    %v1555 = vshrl.u32 %v1554, 7
    %v1556 = vsub.s32 %v1553, %v1555
    %v1557 = vrot.slane %v1543, %v1556
    %v1558 = vcombine.high %v1550, %v1550
    %v1559 = vcombine.high %v1557, %v1557
    %v1560 = vcombine.high %v1316, %v1316
    %v1562 = vunpack.c.l.s4 1983009808
    %v1563 = vunpack.c.0.s8 %v1562
    %v1564 = vlaneseq
    %v1565 = vshrl.u32 %v1564, 7
    %v1566 = vsub.s32 %v1563, %v1565
    %v1567 = vrot.slane %v1316, %v1566
    %v1569 = vunpack.c.l.s4 1983009808
    %v1570 = vunpack.c.0.s8 %v1569
    %v1571 = vlaneseq
    %v1572 = vshrl.u32 %v1571, 7
    %v1573 = vsub.s32 %v1570, %v1572
    %v1574 = vrot.slane %v1560, %v1573
    %v1575 = vcombine.high %v1567, %v1567
    %v1576 = vcombine.high %v1574, %v1574
    %v1577 = vcombine.high %v1317, %v1317
    %v1579 = vunpack.c.l.s4 1983009808
    %v1580 = vunpack.c.0.s8 %v1579
    %v1581 = vlaneseq
    %v1582 = vshrl.u32 %v1581, 7
    %v1583 = vsub.s32 %v1580, %v1582
    %v1584 = vrot.slane %v1317, %v1583
    %v1586 = vunpack.c.l.s4 1983009808
    %v1587 = vunpack.c.0.s8 %v1586
    %v1588 = vlaneseq
    %v1589 = vshrl.u32 %v1588, 7
    %v1590 = vsub.s32 %v1587, %v1589
    %v1591 = vrot.slane %v1577, %v1590
    %v1592 = vcombine.high %v1584, %v1584
    %v1593 = vcombine.high %v1591, %v1591
    %v1594 = vcombine.high %v1318, %v1318
    %v1596 = vunpack.c.l.s4 1983009808
    %v1597 = vunpack.c.0.s8 %v1596
    %v1598 = vlaneseq
    %v1599 = vshrl.u32 %v1598, 7
    %v1600 = vsub.s32 %v1597, %v1599
    %v1601 = vrot.slane %v1318, %v1600
    %v1603 = vunpack.c.l.s4 1983009808
    %v1604 = vunpack.c.0.s8 %v1603
    %v1605 = vlaneseq
    %v1606 = vshrl.u32 %v1605, 7
    %v1607 = vsub.s32 %v1604, %v1606
    %v1608 = vrot.slane %v1594, %v1607
    %v1609 = vcombine.high %v1601, %v1601
    %v1610 = vcombine.high %v1608, %v1608
    %v1611 = vcombine.high %v1319, %v1319
    %v1613 = vunpack.c.l.s4 1983009808
    %v1614 = vunpack.c.0.s8 %v1613
    %v1615 = vlaneseq
    %v1616 = vshrl.u32 %v1615, 7
    %v1617 = vsub.s32 %v1614, %v1616
    %v1618 = vrot.slane %v1319, %v1617
    %v1620 = vunpack.c.l.s4 1983009808
    %v1621 = vunpack.c.0.s8 %v1620
    %v1622 = vlaneseq
    %v1623 = vshrl.u32 %v1622, 7
    %v1624 = vsub.s32 %v1621, %v1623
    %v1625 = vrot.slane %v1611, %v1624
    %v1626 = vcombine.high %v1618, %v1618
    %v1627 = vcombine.high %v1625, %v1625
    %v1628 = vcombine.high %v1320, %v1320
    %v1630 = vunpack.c.l.s4 1983009808
    %v1631 = vunpack.c.0.s8 %v1630
    %v1632 = vlaneseq
    %v1633 = vshrl.u32 %v1632, 7
    %v1634 = vsub.s32 %v1631, %v1633
    %v1635 = vrot.slane %v1320, %v1634
    %v1637 = vunpack.c.l.s4 1983009808
    %v1638 = vunpack.c.0.s8 %v1637
    %v1639 = vlaneseq
    %v1640 = vshrl.u32 %v1639, 7
    %v1641 = vsub.s32 %v1638, %v1640
    %v1642 = vrot.slane %v1628, %v1641
    %v1643 = vcombine.high %v1635, %v1635
    %v1644 = vcombine.high %v1642, %v1642
    %v1645 = vcombine.high %v1321, %v1321
    %v1647 = vunpack.c.l.s4 1983009808
    %v1648 = vunpack.c.0.s8 %v1647
    %v1649 = vlaneseq
    %v1650 = vshrl.u32 %v1649, 7
    %v1651 = vsub.s32 %v1648, %v1650
    %v1652 = vrot.slane %v1321, %v1651
    %v1654 = vunpack.c.l.s4 1983009808
    %v1655 = vunpack.c.0.s8 %v1654
    %v1656 = vlaneseq
    %v1657 = vshrl.u32 %v1656, 7
    %v1658 = vsub.s32 %v1655, %v1657
    %v1659 = vrot.slane %v1645, %v1658
    %v1660 = vcombine.high %v1652, %v1652
    %v1661 = vcombine.high %v1659, %v1659
    %v1662 = vcombine.high %v1322, %v1322
    %v1664 = vunpack.c.l.s4 1983009808
    %v1665 = vunpack.c.0.s8 %v1664
    %v1666 = vlaneseq
    %v1667 = vshrl.u32 %v1666, 7
    %v1668 = vsub.s32 %v1665, %v1667
    %v1669 = vrot.slane %v1322, %v1668
    %v1671 = vunpack.c.l.s4 1983009808
    %v1672 = vunpack.c.0.s8 %v1671
    %v1673 = vlaneseq
    %v1674 = vshrl.u32 %v1673, 7
    %v1675 = vsub.s32 %v1672, %v1674
    %v1676 = vrot.slane %v1662, %v1675
    %v1677 = vcombine.high %v1669, %v1669
    %v1678 = vcombine.high %v1676, %v1676
    %v1679 = vcombine.high %v1323, %v1323
    %v1681 = vunpack.c.l.s4 1983009808
    %v1682 = vunpack.c.0.s8 %v1681
    %v1683 = vlaneseq
    %v1684 = vshrl.u32 %v1683, 7
    %v1685 = vsub.s32 %v1682, %v1684
    %v1686 = vrot.slane %v1323, %v1685
    %v1688 = vunpack.c.l.s4 1983009808
    %v1689 = vunpack.c.0.s8 %v1688
    %v1690 = vlaneseq
    %v1691 = vshrl.u32 %v1690, 7
    %v1692 = vsub.s32 %v1689, %v1691
    %v1693 = vrot.slane %v1679, %v1692
    %v1694 = vcombine.high %v1686, %v1686
    %v1695 = vcombine.high %v1693, %v1693
    %v1696 = vcombine.high %v1324, %v1324
    %v1698 = vunpack.c.l.s4 1983009808
    %v1699 = vunpack.c.0.s8 %v1698
    %v1700 = vlaneseq
    %v1701 = vshrl.u32 %v1700, 7
    %v1702 = vsub.s32 %v1699, %v1701
    %v1703 = vrot.slane %v1324, %v1702
    %v1705 = vunpack.c.l.s4 1983009808
    %v1706 = vunpack.c.0.s8 %v1705
    %v1707 = vlaneseq
    %v1708 = vshrl.u32 %v1707, 7
    %v1709 = vsub.s32 %v1706, %v1708
    %v1710 = vrot.slane %v1696, %v1709
    %v1711 = vcombine.high %v1703, %v1703
    %v1712 = vcombine.high %v1710, %v1710
    %v1713 = vcombine.high %v1325, %v1325
    %v1715 = vunpack.c.l.s4 1983009808
    %v1716 = vunpack.c.0.s8 %v1715
    %v1717 = vlaneseq
    %v1718 = vshrl.u32 %v1717, 7
    %v1719 = vsub.s32 %v1716, %v1718
    %v1720 = vrot.slane %v1325, %v1719
    %v1722 = vunpack.c.l.s4 1983009808
    %v1723 = vunpack.c.0.s8 %v1722
    %v1724 = vlaneseq
    %v1725 = vshrl.u32 %v1724, 7
    %v1726 = vsub.s32 %v1723, %v1725
    %v1727 = vrot.slane %v1713, %v1726
    %v1728 = vcombine.high %v1720, %v1720
    %v1729 = vcombine.high %v1727, %v1727
    %v1730 = vcombine.high %v1326, %v1326
    %v1732 = vunpack.c.l.s4 1983009808
    %v1733 = vunpack.c.0.s8 %v1732
    %v1734 = vlaneseq
    %v1735 = vshrl.u32 %v1734, 7
    %v1736 = vsub.s32 %v1733, %v1735
    %v1737 = vrot.slane %v1326, %v1736
    %v1739 = vunpack.c.l.s4 1983009808
    %v1740 = vunpack.c.0.s8 %v1739
    %v1741 = vlaneseq
    %v1742 = vshrl.u32 %v1741, 7
    %v1743 = vsub.s32 %v1740, %v1742
    %v1744 = vrot.slane %v1730, %v1743
    %v1745 = vcombine.high %v1737, %v1737
    %v1746 = vcombine.high %v1744, %v1744
    %v1747 = vcombine.high %v1327, %v1327
    %v1749 = vunpack.c.l.s4 1983009808
    %v1750 = vunpack.c.0.s8 %v1749
    %v1751 = vlaneseq
    %v1752 = vshrl.u32 %v1751, 7
    %v1753 = vsub.s32 %v1750, %v1752
    %v1754 = vrot.slane %v1327, %v1753
    %v1756 = vunpack.c.l.s4 1983009808
    %v1757 = vunpack.c.0.s8 %v1756
    %v1758 = vlaneseq
    %v1759 = vshrl.u32 %v1758, 7
    %v1760 = vsub.s32 %v1757, %v1759
    %v1761 = vrot.slane %v1747, %v1760
    %v1762 = vcombine.high %v1754, %v1754
    %v1763 = vcombine.high %v1761, %v1761
    %v1764 = vcombine.high %v1328, %v1328
    %v1766 = vunpack.c.l.s4 1983009808
    %v1767 = vunpack.c.0.s8 %v1766
    %v1768 = vlaneseq
    %v1769 = vshrl.u32 %v1768, 7
    %v1770 = vsub.s32 %v1767, %v1769
    %v1771 = vrot.slane %v1328, %v1770
    %v1773 = vunpack.c.l.s4 1983009808
    %v1774 = vunpack.c.0.s8 %v1773
    %v1775 = vlaneseq
    %v1776 = vshrl.u32 %v1775, 7
    %v1777 = vsub.s32 %v1774, %v1776
    %v1778 = vrot.slane %v1764, %v1777
    %v1779 = vcombine.high %v1771, %v1771
    %v1780 = vcombine.high %v1778, %v1778
    %v1781 = vcombine.high %v1329, %v1329
    %v1783 = vunpack.c.l.s4 1983009808
    %v1784 = vunpack.c.0.s8 %v1783
    %v1785 = vlaneseq
    %v1786 = vshrl.u32 %v1785, 7
    %v1787 = vsub.s32 %v1784, %v1786
    %v1788 = vrot.slane %v1329, %v1787
    %v1790 = vunpack.c.l.s4 1983009808
    %v1791 = vunpack.c.0.s8 %v1790
    %v1792 = vlaneseq
    %v1793 = vshrl.u32 %v1792, 7
    %v1794 = vsub.s32 %v1791, %v1793
    %v1795 = vrot.slane %v1781, %v1794
    %v1796 = vcombine.high %v1788, %v1788
    %v1797 = vcombine.high %v1795, %v1795
    %v1798 = vcombine.high %v1330, %v1330
    %v1800 = vunpack.c.l.s4 1983009808
    %v1801 = vunpack.c.0.s8 %v1800
    %v1802 = vlaneseq
    %v1803 = vshrl.u32 %v1802, 7
    %v1804 = vsub.s32 %v1801, %v1803
    %v1805 = vrot.slane %v1330, %v1804
    %v1807 = vunpack.c.l.s4 1983009808
    %v1808 = vunpack.c.0.s8 %v1807
    %v1809 = vlaneseq
    %v1810 = vshrl.u32 %v1809, 7
    %v1811 = vsub.s32 %v1808, %v1810
    %v1812 = vrot.slane %v1798, %v1811
    %v1813 = vcombine.high %v1805, %v1805
    %v1814 = vcombine.high %v1812, %v1812
    %v1815 = vcombine.high %v1331, %v1331
    %v1817 = vunpack.c.l.s4 1983009808
    %v1818 = vunpack.c.0.s8 %v1817
    %v1819 = vlaneseq
    %v1820 = vshrl.u32 %v1819, 7
    %v1821 = vsub.s32 %v1818, %v1820
    %v1822 = vrot.slane %v1331, %v1821
    %v1824 = vunpack.c.l.s4 1983009808
    %v1825 = vunpack.c.0.s8 %v1824
    %v1826 = vlaneseq
    %v1827 = vshrl.u32 %v1826, 7
    %v1828 = vsub.s32 %v1825, %v1827
    %v1829 = vrot.slane %v1815, %v1828
    %v1830 = vcombine.high %v1822, %v1822
    %v1831 = vcombine.high %v1829, %v1829
    %v1832 = vcombine.high %v1332, %v1332
    %v1834 = vunpack.c.l.s4 1983009808
    %v1835 = vunpack.c.0.s8 %v1834
    %v1836 = vlaneseq
    %v1837 = vshrl.u32 %v1836, 7
    %v1838 = vsub.s32 %v1835, %v1837
    %v1839 = vrot.slane %v1332, %v1838
    %v1841 = vunpack.c.l.s4 1983009808
    %v1842 = vunpack.c.0.s8 %v1841
    %v1843 = vlaneseq
    %v1844 = vshrl.u32 %v1843, 7
    %v1845 = vsub.s32 %v1842, %v1844
    %v1846 = vrot.slane %v1832, %v1845
    %v1847 = vcombine.high %v1839, %v1839
    %v1848 = vcombine.high %v1846, %v1846
    %v1849 = vcombine.high %v1333, %v1333
    %v1851 = vunpack.c.l.s4 1983009808
    %v1852 = vunpack.c.0.s8 %v1851
    %v1853 = vlaneseq
    %v1854 = vshrl.u32 %v1853, 7
    %v1855 = vsub.s32 %v1852, %v1854
    %v1856 = vrot.slane %v1333, %v1855
    %v1858 = vunpack.c.l.s4 1983009808
    %v1859 = vunpack.c.0.s8 %v1858
    %v1860 = vlaneseq
    %v1861 = vshrl.u32 %v1860, 7
    %v1862 = vsub.s32 %v1859, %v1861
    %v1863 = vrot.slane %v1849, %v1862
    %v1864 = vcombine.high %v1856, %v1856
    %v1865 = vcombine.high %v1863, %v1863
    %v1866 = vcombine.high %v1334, %v1334
    %v1868 = vunpack.c.l.s4 1983009808
    %v1869 = vunpack.c.0.s8 %v1868
    %v1870 = vlaneseq
    %v1871 = vshrl.u32 %v1870, 7
    %v1872 = vsub.s32 %v1869, %v1871
    %v1873 = vrot.slane %v1334, %v1872
    %v1875 = vunpack.c.l.s4 1983009808
    %v1876 = vunpack.c.0.s8 %v1875
    %v1877 = vlaneseq
    %v1878 = vshrl.u32 %v1877, 7
    %v1879 = vsub.s32 %v1876, %v1878
    %v1880 = vrot.slane %v1866, %v1879
    %v1881 = vcombine.high %v1873, %v1873
    %v1882 = vcombine.high %v1880, %v1880
    %v1883 = vcombine.high %v1335, %v1335
    %v1885 = vunpack.c.l.s4 1983009808
    %v1886 = vunpack.c.0.s8 %v1885
    %v1887 = vlaneseq
    %v1888 = vshrl.u32 %v1887, 7
    %v1889 = vsub.s32 %v1886, %v1888
    %v1890 = vrot.slane %v1335, %v1889
    %v1892 = vunpack.c.l.s4 1983009808
    %v1893 = vunpack.c.0.s8 %v1892
    %v1894 = vlaneseq
    %v1895 = vshrl.u32 %v1894, 7
    %v1896 = vsub.s32 %v1893, %v1895
    %v1897 = vrot.slane %v1883, %v1896
    %v1898 = vcombine.high %v1890, %v1890
    %v1899 = vcombine.high %v1897, %v1897
    %v1900 = vcombine.high %v1336, %v1336
    %v1902 = vunpack.c.l.s4 1983009808
    %v1903 = vunpack.c.0.s8 %v1902
    %v1904 = vlaneseq
    %v1905 = vshrl.u32 %v1904, 7
    %v1906 = vsub.s32 %v1903, %v1905
    %v1907 = vrot.slane %v1336, %v1906
    %v1909 = vunpack.c.l.s4 1983009808
    %v1910 = vunpack.c.0.s8 %v1909
    %v1911 = vlaneseq
    %v1912 = vshrl.u32 %v1911, 7
    %v1913 = vsub.s32 %v1910, %v1912
    %v1914 = vrot.slane %v1900, %v1913
    %v1915 = vcombine.high %v1907, %v1907
    %v1916 = vcombine.high %v1914, %v1914
    %v1917 = vcombine.high %v1337, %v1337
    %v1919 = vunpack.c.l.s4 1983009808
    %v1920 = vunpack.c.0.s8 %v1919
    %v1921 = vlaneseq
    %v1922 = vshrl.u32 %v1921, 7
    %v1923 = vsub.s32 %v1920, %v1922
    %v1924 = vrot.slane %v1337, %v1923
    %v1926 = vunpack.c.l.s4 1983009808
    %v1927 = vunpack.c.0.s8 %v1926
    %v1928 = vlaneseq
    %v1929 = vshrl.u32 %v1928, 7
    %v1930 = vsub.s32 %v1927, %v1929
    %v1931 = vrot.slane %v1917, %v1930
    %v1932 = vcombine.high %v1924, %v1924
    %v1933 = vcombine.high %v1931, %v1931
    %v1934 = vcombine.high %v1338, %v1338
    %v1936 = vunpack.c.l.s4 1983009808
    %v1937 = vunpack.c.0.s8 %v1936
    %v1938 = vlaneseq
    %v1939 = vshrl.u32 %v1938, 7
    %v1940 = vsub.s32 %v1937, %v1939
    %v1941 = vrot.slane %v1338, %v1940
    %v1943 = vunpack.c.l.s4 1983009808
    %v1944 = vunpack.c.0.s8 %v1943
    %v1945 = vlaneseq
    %v1946 = vshrl.u32 %v1945, 7
    %v1947 = vsub.s32 %v1944, %v1946
    %v1948 = vrot.slane %v1934, %v1947
    %v1949 = vcombine.high %v1941, %v1941
    %vm2085 = vcmask 1041408
    %v2086 = vsel %vm2085, %v1380, 0.0
    %v2087 = vsel %vm2085, %v1388, 0.0
    %v2088 = vadd.f32 %v2086, %v2087
    %v2089 = vsel %vm2085, %v1387, 0.0
    %v2090 = vadd.f32 %v2088, %v2089
    %v2091 = vsel %vm2085, %v1389, 0.0
    %v2092 = vadd.f32 %v2090, %v2091
    %v2093 = vsel %vm2085, %v1397, 0.0
    %v2094 = vadd.f32 %v2092, %v2093
    %v2095 = vsel %vm2085, %v1405, 0.0
    %v2096 = vadd.f32 %v2094, %v2095
    %v2097 = vsel %vm2085, %v1404, 0.0
    %v2098 = vadd.f32 %v2096, %v2097
    %v2099 = vsel %vm2085, %v1406, 0.0
    %v2100 = vadd.f32 %v2098, %v2099
    %v2101 = vsel %vm2085, %v1414, 0.0
    %v2102 = vadd.f32 %v2100, %v2101
    %v2103 = vsel %vm2085, %v1422, 0.0
    %v2104 = vadd.f32 %v2102, %v2103
    %v2105 = vsel %vm2085, %v1421, 0.0
    %v2106 = vadd.f32 %v2104, %v2105
    %v2107 = vsel %vm2085, %v1423, 0.0
    %v2108 = vadd.f32 %v2106, %v2107
    %v2109 = vsel %vm2085, %v1431, 0.0
    %v2110 = vadd.f32 %v2108, %v2109
    %v2111 = vsel %vm2085, %v1439, 0.0
    %v2112 = vadd.f32 %v2110, %v2111
    %v2113 = vsel %vm2085, %v1438, 0.0
    %v2114 = vadd.f32 %v2112, %v2113
    %v2115 = vsel %vm2085, %v1440, 0.0
    %v2116 = vadd.f32 %v2114, %v2115
    %v2117 = vsel %vm2085, %v1448, 0.0
    %v2118 = vadd.f32 %v2116, %v2117
    %v2119 = vsel %vm2085, %v1456, 0.0
    %v2120 = vadd.f32 %v2118, %v2119
    %v2121 = vsel %vm2085, %v1455, 0.0
    %v2122 = vadd.f32 %v2120, %v2121
    %v2123 = vsel %vm2085, %v1457, 0.0
    %v2124 = vadd.f32 %v2122, %v2123
    %v2125 = vsel %vm2085, %v1465, 0.0
    %v2126 = vadd.f32 %v2124, %v2125
    %v2127 = vsel %vm2085, %v1473, 0.0
    %v2128 = vadd.f32 %v2126, %v2127
    %v2129 = vsel %vm2085, %v1472, 0.0
    %v2130 = vadd.f32 %v2128, %v2129
    %v2131 = vsel %vm2085, %v1474, 0.0
    %v2132 = vadd.f32 %v2130, %v2131
    %v2133 = vsel %vm2085, %v1482, 0.0
    %v2134 = vadd.f32 %v2132, %v2133
    %v2135 = vsel %vm2085, %v1490, 0.0
    %v2136 = vadd.f32 %v2134, %v2135
    %v2137 = vsel %vm2085, %v1489, 0.0
    %v2138 = vadd.f32 %v2136, %v2137
    %v2139 = vsel %vm2085, %v1491, 0.0
    %v2140 = vadd.f32 %v2138, %v2139
    %v2141 = vsel %vm2085, %v1499, 0.0
    %v2142 = vadd.f32 %v2140, %v2141
    %v2143 = vsel %vm2085, %v1507, 0.0
    %v2144 = vadd.f32 %v2142, %v2143
    %v2145 = vsel %vm2085, %v1506, 0.0
    %v2146 = vadd.f32 %v2144, %v2145
    %v2147 = vsel %vm2085, %v1508, 0.0
    %v2148 = vadd.f32 %v2146, %v2147
    %v2149 = vsel %vm2085, %v1516, 0.0
    %v2150 = vadd.f32 %v2148, %v2149
    %v2151 = vsel %vm2085, %v1524, 0.0
    %v2152 = vadd.f32 %v2150, %v2151
    %v2153 = vsel %vm2085, %v1523, 0.0
    %v2154 = vadd.f32 %v2152, %v2153
    %v2155 = vsel %vm2085, %v1525, 0.0
    %v2156 = vadd.f32 %v2154, %v2155
    %v2157 = vsel %vm2085, %v1533, 0.0
    %v2158 = vadd.f32 %v2156, %v2157
    %v2159 = vsel %vm2085, %v1541, 0.0
    %v2160 = vadd.f32 %v2158, %v2159
    %v2161 = vsel %vm2085, %v1540, 0.0
    %v2162 = vadd.f32 %v2160, %v2161
    %v2163 = vsel %vm2085, %v1542, 0.0
    %v2164 = vadd.f32 %v2162, %v2163
    %v2165 = vsel %vm2085, %v1550, 0.0
    %v2166 = vadd.f32 %v2164, %v2165
    %v2167 = vsel %vm2085, %v1558, 0.0
    %v2168 = vadd.f32 %v2166, %v2167
    %v2169 = vsel %vm2085, %v1557, 0.0
    %v2170 = vadd.f32 %v2168, %v2169
    %v2171 = vsel %vm2085, %v1559, 0.0
    %v2172 = vadd.f32 %v2170, %v2171
    %v2173 = vsel %vm2085, %v1567, 0.0
    %v2174 = vadd.f32 %v2172, %v2173
    %v2175 = vsel %vm2085, %v1575, 0.0
    %v2176 = vadd.f32 %v2174, %v2175
    %v2177 = vsel %vm2085, %v1574, 0.0
    %v2178 = vadd.f32 %v2176, %v2177
    %v2179 = vsel %vm2085, %v1576, 0.0
    %v2180 = vadd.f32 %v2178, %v2179
    %v2181 = vsel %vm2085, %v1584, 0.0
    %v2182 = vadd.f32 %v2180, %v2181
    %v2183 = vsel %vm2085, %v1592, 0.0
    %v2184 = vadd.f32 %v2182, %v2183
    %v2185 = vsel %vm2085, %v1591, 0.0
    %v2186 = vadd.f32 %v2184, %v2185
    %v2187 = vsel %vm2085, %v1593, 0.0
    %v2188 = vadd.f32 %v2186, %v2187
    %v2189 = vsel %vm2085, %v1601, 0.0
    %v2190 = vadd.f32 %v2188, %v2189
    %v2191 = vsel %vm2085, %v1609, 0.0
    %v2192 = vadd.f32 %v2190, %v2191
    %v2193 = vsel %vm2085, %v1608, 0.0
    %v2194 = vadd.f32 %v2192, %v2193
    %v2195 = vsel %vm2085, %v1610, 0.0
    %v2196 = vadd.f32 %v2194, %v2195
    %v2197 = vsel %vm2085, %v1618, 0.0
    %v2198 = vadd.f32 %v2196, %v2197
    %v2199 = vsel %vm2085, %v1626, 0.0
    %v2200 = vadd.f32 %v2198, %v2199
    %v2201 = vsel %vm2085, %v1625, 0.0
    %v2202 = vadd.f32 %v2200, %v2201
    %v2203 = vsel %vm2085, %v1627, 0.0
    %v2204 = vadd.f32 %v2202, %v2203
    %v2205 = vsel %vm2085, %v1635, 0.0
    %v2206 = vadd.f32 %v2204, %v2205
    %v2207 = vsel %vm2085, %v1643, 0.0
    %v2208 = vadd.f32 %v2206, %v2207
    %v2209 = vsel %vm2085, %v1642, 0.0
    %v2210 = vadd.f32 %v2208, %v2209
    %v2211 = vsel %vm2085, %v1644, 0.0
    %v2212 = vadd.f32 %v2210, %v2211
    %v2213 = vsel %vm2085, %v1652, 0.0
    %v2214 = vadd.f32 %v2212, %v2213
    %v2215 = vsel %vm2085, %v1660, 0.0
    %v2216 = vadd.f32 %v2214, %v2215
    %v2217 = vsel %vm2085, %v1659, 0.0
    %v2218 = vadd.f32 %v2216, %v2217
    %v2219 = vsel %vm2085, %v1661, 0.0
    %v2220 = vadd.f32 %v2218, %v2219
    %v2221 = vsel %vm2085, %v1669, 0.0
    %v2222 = vadd.f32 %v2220, %v2221
    %v2223 = vsel %vm2085, %v1677, 0.0
    %v2224 = vadd.f32 %v2222, %v2223
    %v2225 = vsel %vm2085, %v1676, 0.0
    %v2226 = vadd.f32 %v2224, %v2225
    %v2227 = vsel %vm2085, %v1678, 0.0
    %v2228 = vadd.f32 %v2226, %v2227
    %v2229 = vsel %vm2085, %v1686, 0.0
    %v2230 = vadd.f32 %v2228, %v2229
    %v2231 = vsel %vm2085, %v1694, 0.0
    %v2232 = vadd.f32 %v2230, %v2231
    %v2233 = vsel %vm2085, %v1693, 0.0
    %v2234 = vadd.f32 %v2232, %v2233
    %v2235 = vsel %vm2085, %v1695, 0.0
    %v2236 = vadd.f32 %v2234, %v2235
    %v2237 = vsel %vm2085, %v1703, 0.0
    %v2238 = vadd.f32 %v2236, %v2237
    %v2239 = vsel %vm2085, %v1711, 0.0
    %v2240 = vadd.f32 %v2238, %v2239
    %v2241 = vsel %vm2085, %v1710, 0.0
    %v2242 = vadd.f32 %v2240, %v2241
    %v2243 = vsel %vm2085, %v1712, 0.0
    %v2244 = vadd.f32 %v2242, %v2243
    %v2245 = vsel %vm2085, %v1720, 0.0
    %v2246 = vadd.f32 %v2244, %v2245
    %v2247 = vsel %vm2085, %v1728, 0.0
    %v2248 = vadd.f32 %v2246, %v2247
    %v2249 = vsel %vm2085, %v1727, 0.0
    %v2250 = vadd.f32 %v2248, %v2249
    %v2251 = vsel %vm2085, %v1729, 0.0
    %v2252 = vadd.f32 %v2250, %v2251
    %v2253 = vsel %vm2085, %v1737, 0.0
    %v2254 = vadd.f32 %v2252, %v2253
    %v2255 = vsel %vm2085, %v1745, 0.0
    %v2256 = vadd.f32 %v2254, %v2255
    %v2257 = vsel %vm2085, %v1744, 0.0
    %v2258 = vadd.f32 %v2256, %v2257
    %v2259 = vsel %vm2085, %v1746, 0.0
    %v2260 = vadd.f32 %v2258, %v2259
    %v2261 = vsel %vm2085, %v1754, 0.0
    %v2262 = vadd.f32 %v2260, %v2261
    %v2263 = vsel %vm2085, %v1762, 0.0
    %v2264 = vadd.f32 %v2262, %v2263
    %v2265 = vsel %vm2085, %v1761, 0.0
    %v2266 = vadd.f32 %v2264, %v2265
    %v2267 = vsel %vm2085, %v1763, 0.0
    %v2268 = vadd.f32 %v2266, %v2267
    %v2269 = vsel %vm2085, %v1771, 0.0
    %v2270 = vadd.f32 %v2268, %v2269
    %v2271 = vsel %vm2085, %v1779, 0.0
    %v2272 = vadd.f32 %v2270, %v2271
    %v2273 = vsel %vm2085, %v1778, 0.0
    %v2274 = vadd.f32 %v2272, %v2273
    %v2275 = vsel %vm2085, %v1780, 0.0
    %v2276 = vadd.f32 %v2274, %v2275
    %v2277 = vsel %vm2085, %v1788, 0.0
    %v2278 = vadd.f32 %v2276, %v2277
    %v2279 = vsel %vm2085, %v1796, 0.0
    %v2280 = vadd.f32 %v2278, %v2279
    %v2281 = vsel %vm2085, %v1795, 0.0
    %v2282 = vadd.f32 %v2280, %v2281
    %v2283 = vsel %vm2085, %v1797, 0.0
    %v2284 = vadd.f32 %v2282, %v2283
    %v2285 = vsel %vm2085, %v1805, 0.0
    %v2286 = vadd.f32 %v2284, %v2285
    %v2287 = vsel %vm2085, %v1813, 0.0
    %v2288 = vadd.f32 %v2286, %v2287
    %v2289 = vsel %vm2085, %v1812, 0.0
    %v2290 = vadd.f32 %v2288, %v2289
    %v2291 = vsel %vm2085, %v1814, 0.0
    %v2292 = vadd.f32 %v2290, %v2291
    %v2293 = vsel %vm2085, %v1822, 0.0
    %v2294 = vadd.f32 %v2292, %v2293
    %v2295 = vsel %vm2085, %v1830, 0.0
    %v2296 = vadd.f32 %v2294, %v2295
    %v2297 = vsel %vm2085, %v1829, 0.0
    %v2298 = vadd.f32 %v2296, %v2297
    %v2299 = vsel %vm2085, %v1831, 0.0
    %v2300 = vadd.f32 %v2298, %v2299
    %v2301 = vsel %vm2085, %v1839, 0.0
    %v2302 = vadd.f32 %v2300, %v2301
    %v2303 = vsel %vm2085, %v1847, 0.0
    %v2304 = vadd.f32 %v2302, %v2303
    %v2305 = vsel %vm2085, %v1846, 0.0
    %v2306 = vadd.f32 %v2304, %v2305
    %v2307 = vsel %vm2085, %v1848, 0.0
    %v2308 = vadd.f32 %v2306, %v2307
    %v2309 = vsel %vm2085, %v1856, 0.0
    %v2310 = vadd.f32 %v2308, %v2309
    %v2311 = vsel %vm2085, %v1864, 0.0
    %v2312 = vadd.f32 %v2310, %v2311
    %v2313 = vsel %vm2085, %v1863, 0.0
    %v2314 = vadd.f32 %v2312, %v2313
    %v2315 = vsel %vm2085, %v1865, 0.0
    %v2316 = vadd.f32 %v2314, %v2315
    %v2317 = vsel %vm2085, %v1873, 0.0
    %v2318 = vadd.f32 %v2316, %v2317
    %v2319 = vsel %vm2085, %v1881, 0.0
    %v2320 = vadd.f32 %v2318, %v2319
    %v2321 = vsel %vm2085, %v1880, 0.0
    %v2322 = vadd.f32 %v2320, %v2321
    %v2323 = vsel %vm2085, %v1882, 0.0
    %v2324 = vadd.f32 %v2322, %v2323
    %v2325 = vsel %vm2085, %v1890, 0.0
    %v2326 = vadd.f32 %v2324, %v2325
    %v2327 = vsel %vm2085, %v1898, 0.0
    %v2328 = vadd.f32 %v2326, %v2327
    %v2329 = vsel %vm2085, %v1897, 0.0
    %v2330 = vadd.f32 %v2328, %v2329
    %v2331 = vsel %vm2085, %v1899, 0.0
    %v2332 = vadd.f32 %v2330, %v2331
    %v2333 = vsel %vm2085, %v1907, 0.0
    %v2334 = vadd.f32 %v2332, %v2333
    %v2335 = vsel %vm2085, %v1915, 0.0
    %v2336 = vadd.f32 %v2334, %v2335
    %v2337 = vsel %vm2085, %v1914, 0.0
    %v2338 = vadd.f32 %v2336, %v2337
    %v2339 = vsel %vm2085, %v1916, 0.0
    %v2340 = vadd.f32 %v2338, %v2339
    %v2341 = vsel %vm2085, %v1924, 0.0
    %v2342 = vadd.f32 %v2340, %v2341
    %v2343 = vsel %vm2085, %v1932, 0.0
    %v2344 = vadd.f32 %v2342, %v2343
    %v2345 = vsel %vm2085, %v1931, 0.0
    %v2346 = vadd.f32 %v2344, %v2345
    %v2347 = vsel %vm2085, %v1933, 0.0
    %v2348 = vadd.f32 %v2346, %v2347
    %v2349 = vsel %vm2085, %v1941, 0.0
    %v2350 = vadd.f32 %v2348, %v2349
    %v2351 = vsel %vm2085, %v1949, 0.0
    %v2352 = vadd.f32 %v2350, %v2351
    %v2353 = vsel %vm2085, %v1948, 0.0
    %v2354 = vadd.f32 %v2352, %v2353
    %2355 = vadd.xlane.f32.xlu0 %v2354
    %v2356 = vpop.xlane.xlu0 %2355
    %vm2357 = vcmask 1024
    %2358 = vst.msk [vmem:[%s2] sm:$0x3] %vm2357, %v2356
    // Predicated region
    $region18: #{tpu_custom_call.1} parent=1 // pred_check
      _
    $region19: #{tpu_custom_call.1} parent=1 // pred_check_branch
      %2360 = sbr.rel (0) target = $region21
    $region20: #{tpu_custom_call.1} parent=1 // pred_region
      _
    $region21: #{tpu_custom_call.1} parent=1 // pred_fallthru
      _
    // Predicated region
    $region22: #{tpu_custom_call.1} parent=1 // pred_check
      _
    $region23: #{tpu_custom_call.1} parent=1 // pred_check_branch
      %2362 = sbr.rel (0) target = $region25
    $region24: #{tpu_custom_call.1} parent=1 // pred_region
      _
    $region25: #{tpu_custom_call.1} parent=1 // pred_fallthru
      _
    %2363 = vsyncpa [#allocation3], 1
    %2364 = vsyncpa [#allocation5], 1

</llo_original>
